<compile_context>
chip_gen: v7x
topology: tpu7x:2x2x1
jax: 0.10.0
libtpu: 0.0.40
codegen_flags: <defaults>
</compile_context>

<pallas_src>
import jax
import jax.numpy as jnp
import numpy as np
from jax.experimental import pallas as pl
from jax.experimental.pallas import tpu as pltpu


def _lstm_stack_kernel(
    x_ref,       # (seq, In)
    wih1_ref,    # (In, 4H)
    wrec_ref,    # (3H, 4H): rows [0:H)=Whh1, [H:2H)=Wih2, [2H:3H)=Whh2
    bias_ref,    # (2, 4H):  row 0 = b1 (= b_ih1 + b_hh1), row 1 = b2
    wlinb_ref,   # (H+1, Out): rows [0:H)=Wlin, row H = blin
    state_ref,   # (4, H): h01, c01, h02, c02
    out_ref,     # (seq, Out) log-softmax output
):
    H = state_ref.shape[1]
    seq = x_ref.shape[0]

    # ---- Hoist loop-invariant weight loads (stay resident in vregs) ----
    whh1 = wrec_ref[0 * H:1 * H, :]
    wih2 = wrec_ref[1 * H:2 * H, :]
    whh2 = wrec_ref[2 * H:3 * H, :]
    bias = bias_ref[...]
    b2 = bias[1:2, :]

    # ---- Non-recurrent layer-1 input projection, all timesteps at once ----
    # One (seq, In) @ (In, 4H) MXU pass instead of seq row-vector matmuls.
    gates1_pre = (
        jnp.dot(x_ref[...], wih1_ref[...], preferred_element_type=jnp.float32)
        + bias[0:1, :]
    )  # (seq, 4H)

    def activate(gates):
        # One full-width sigmoid over all four gate slots; tanh on the g slot.
        # (EUP not the binding unit here per review - leave un-sliced.)
        sig = jax.nn.sigmoid(gates)
        i = sig[:, 0 * H:1 * H]
        f = sig[:, 1 * H:2 * H]
        o = sig[:, 3 * H:4 * H]
        g = jnp.tanh(gates[:, 2 * H:3 * H])
        return i, f, g, o

    # Recurrent state carried as SSA values (vregs), not VMEM round-trips.
    states = state_ref[...]
    h1 = states[0:1, :]
    c1 = states[1:2, :]
    h2 = states[2:3, :]
    c2 = states[3:4, :]

    h2_steps = []

    # ---- Statically unrolled recurrence (seq is small & compile-time) ----
    for t in range(seq):
        # Both recurrent matmuls depend only on step t-1 state -> off the
        # within-step serial chain; scheduler can overlap them with the
        # previous step's tail / each other.
        rec1 = jnp.dot(h1, whh1, preferred_element_type=jnp.float32)
        rec2 = jnp.dot(h2, whh2, preferred_element_type=jnp.float32)

        # LSTM layer 1.
        g1 = gates1_pre[t:t + 1, :] + rec1
        i1, f1, gg1, o1 = activate(g1)
        c1 = f1 * c1 + i1 * gg1
        h1 = o1 * jnp.tanh(c1)

        # dropout1: identity (eval mode)

        # LSTM layer 2: only the h1_t @ Wih2 (K = H) matmul is serial.
        g2 = jnp.dot(h1, wih2, preferred_element_type=jnp.float32) + rec2 + b2
        i2, f2, gg2, o2 = activate(g2)
        c2 = f2 * c2 + i2 * gg2
        h2 = o2 * jnp.tanh(c2)

        # dropout2: identity (eval mode)
        h2_steps.append(h2)

    # (seq, H) built from vregs directly - no VMEM scratch round trip.
    h2seq = jnp.concatenate(h2_steps, axis=0)

    # ---- Linear + log_softmax, deferred out of the recurrence ----
    wl = wlinb_ref[...]
    logits = (
        jnp.dot(h2seq, wl[0:H, :], preferred_element_type=jnp.float32)
        + wl[H:H + 1, :]
    )  # (seq, Out)
    m = jnp.max(logits, axis=-1, keepdims=True)
    lse = m + jnp.log(jnp.sum(jnp.exp(logits - m), axis=-1, keepdims=True))
    out_ref[...] = (logits - lse).astype(out_ref.dtype)


@jax.jit
def lstm_forward(x, params):
    """x: (seq, 1, input_size) float32 -> (seq, output_size) log-probs."""
    seq, batch, _ = x.shape
    assert batch == 1, "module is used with batch=1"
    x2d = x[:, 0, :]
    H = params["whh1"].shape[0]
    out_size = params["blin"].shape[-1]

    # Pack the many tiny operands into a few stacked arrays -> fewer DMAs.
    wrec = jnp.concatenate(
        [params["whh1"], params["wih2"], params["whh2"]], axis=0)    # (3H, 4H)
    bias = jnp.concatenate([params["b1"], params["b2"]], axis=0)     # (2, 4H)
    wlinb = jnp.concatenate([params["wlin"], params["blin"]], axis=0)  # (H+1, Out)
    states = jnp.concatenate(
        [params["h01"], params["c01"], params["h02"], params["c02"]],
        axis=0)                                                       # (4, H)

    vmem = pl.BlockSpec(memory_space=pltpu.MemorySpace.VMEM)
    return pl.pallas_call(
        _lstm_stack_kernel,
        out_shape=jax.ShapeDtypeStruct((seq, out_size), jnp.float32),
        in_specs=[vmem] * 6,
        out_specs=vmem,
    )(x2d, params["wih1"], wrec, bias, wlinb, states)


def init_params(key, input_size, hidden_size, output_size):
    """Deterministic init mirroring PyTorch's uniform(-1/sqrt(H), 1/sqrt(H))."""
    ks = jax.random.split(key, 16)
    kH = 1.0 / np.sqrt(hidden_size)

    def u(k, shape, bound):
        return jax.random.uniform(k, shape, jnp.float32, -bound, bound)

    # PyTorch stores weight_ih as (4H, In); we keep the transpose (In, 4H).
    params = {
        "wih1": u(ks[0], (input_size, 4 * hidden_size), kH),
        "whh1": u(ks[1], (hidden_size, 4 * hidden_size), kH),
        "b1":   u(ks[2], (1, 4 * hidden_size), kH)
              + u(ks[3], (1, 4 * hidden_size), kH),   # b_ih + b_hh
        "wih2": u(ks[4], (hidden_size, 4 * hidden_size), kH),
        "whh2": u(ks[5], (hidden_size, 4 * hidden_size), kH),
        "b2":   u(ks[6], (1, 4 * hidden_size), kH)
              + u(ks[7], (1, 4 * hidden_size), kH),
        "wlin": u(ks[8], (hidden_size, output_size), kH),
        "blin": u(ks[9], (1, output_size), kH),
        # init_hidden(): torch.randn(1, 1, hidden_size)
        "h01": jax.random.normal(ks[10], (1, hidden_size), jnp.float32),
        "c01": jax.random.normal(ks[11], (1, hidden_size), jnp.float32),
        "h02": jax.random.normal(ks[12], (1, hidden_size), jnp.float32),
        "c02": jax.random.normal(ks[13], (1, hidden_size), jnp.float32),
    }
    return params


def reference_forward(x, p):
    """Plain-JAX reference (same math as the PyTorch module, eval mode)."""
    H = p["whh1"].shape[0]

    def cell(x_t, h, c, wih, whh, b):
        g = x_t @ wih + h @ whh + b
        i = jax.nn.sigmoid(g[:, 0 * H:1 * H])
        f = jax.nn.sigmoid(g[:, 1 * H:2 * H])
        gg = jnp.tanh(g[:, 2 * H:3 * H])
        o = jax.nn.sigmoid(g[:, 3 * H:4 * H])
        c = f * c + i * gg
        h = o * jnp.tanh(c)
        return h, c

    h1, c1 = p["h01"], p["c01"]
    h2, c2 = p["h02"], p["c02"]
    outs = []
    for t in range(x.shape[0]):
        x_t = x[t]  # (1, In)
        h1, c1 = cell(x_t, h1, c1, p["wih1"], p["whh1"], p["b1"])
        h2, c2 = cell(h1, h2, c2, p["wih2"], p["whh2"], p["b2"])
        logits = h2 @ p["wlin"] + p["blin"]
        outs.append(jax.nn.log_softmax(logits, axis=-1))
    return jnp.concatenate(outs, axis=0)


if __name__ == "__main__":
    input_size, hidden_size, output_size = 32, 32, 32
    seq_len = 8

    key = jax.random.PRNGKey(0)
    k_param, k_x = jax.random.split(key)
    params = init_params(k_param, input_size, hidden_size, output_size)

    # (seq, batch=1, input_size), like stacked one-hot letter inputs.
    x = jax.random.normal(k_x, (seq_len, 1, input_size), jnp.float32)

    out = lstm_forward(x, params)
    out = jax.block_until_ready(out)

    ref = reference_forward(x, params)
    np.testing.assert_allclose(np.asarray(out), np.asarray(ref),
                               rtol=1e-4, atol=1e-4)
    print("KERNEL_OK")
</pallas_src>

<mosaic_0001>
module attributes {stable_mosaic.version = 11 : i64} {
  func.func @_lstm_stack_kernel(%arg0: memref<8x32xf32, #tpu.memory_space<vmem>>, %arg1: memref<32x128xf32, #tpu.memory_space<vmem>>, %arg2: memref<96x128xf32, #tpu.memory_space<vmem>>, %arg3: memref<2x128xf32, #tpu.memory_space<vmem>>, %arg4: memref<33x32xf32, #tpu.memory_space<vmem>>, %arg5: memref<4x32xf32, #tpu.memory_space<vmem>>, %arg6: memref<8x32xf32, #tpu.memory_space<vmem>>) attributes {dimension_semantics = [], scalar_prefetch = 0 : i64, scratch_operands = 0 : i64, tpu.core_type = #tpu.core_type<tc>} {
    %c0 = arith.constant 0 : index
    %c0_0 = arith.constant 0 : index
    %0 = vector.load %arg2[%c0, %c0_0] : memref<96x128xf32, #tpu.memory_space<vmem>>, vector<32x128xf32>
    %c32 = arith.constant 32 : index
    %c0_1 = arith.constant 0 : index
    %1 = vector.load %arg2[%c32, %c0_1] : memref<96x128xf32, #tpu.memory_space<vmem>>, vector<32x128xf32>
    %c64 = arith.constant 64 : index
    %c0_2 = arith.constant 0 : index
    %2 = vector.load %arg2[%c64, %c0_2] : memref<96x128xf32, #tpu.memory_space<vmem>>, vector<32x128xf32>
    %c0_3 = arith.constant 0 : index
    %c0_4 = arith.constant 0 : index
    %3 = vector.load %arg3[%c0_3, %c0_4] : memref<2x128xf32, #tpu.memory_space<vmem>>, vector<2x128xf32>
    %4 = vector.extract_strided_slice %3 {offsets = [1, 0], sizes = [1, 128], strides = [1, 1]} : vector<2x128xf32> to vector<1x128xf32>
    %c0_5 = arith.constant 0 : index
    %c0_6 = arith.constant 0 : index
    %5 = vector.load %arg0[%c0_5, %c0_6] : memref<8x32xf32, #tpu.memory_space<vmem>>, vector<8x32xf32>
    %c0_7 = arith.constant 0 : index
    %c0_8 = arith.constant 0 : index
    %6 = vector.load %arg1[%c0_7, %c0_8] : memref<32x128xf32, #tpu.memory_space<vmem>>, vector<32x128xf32>
    %cst = arith.constant dense<0.000000e+00> : vector<8x128xf32>
    %7 = tpu.matmul %5, %6, %cst {dimension_numbers = #tpu.dot_dimension_numbers<[1], [0], [0], [1], [0, 0, 1, 1], [], []>} : vector<8x32xf32>, vector<32x128xf32>, vector<8x128xf32> -> vector<8x128xf32>
    %8 = vector.extract_strided_slice %3 {offsets = [0, 0], sizes = [1, 128], strides = [1, 1]} : vector<2x128xf32> to vector<1x128xf32>
    %9 = vector.broadcast %8 : vector<1x128xf32> to vector<8x128xf32>
    %10 = arith.addf %7, %9 : vector<8x128xf32>
    %c0_9 = arith.constant 0 : index
    %c0_10 = arith.constant 0 : index
    %11 = vector.load %arg5[%c0_9, %c0_10] : memref<4x32xf32, #tpu.memory_space<vmem>>, vector<4x32xf32>
    %12 = vector.extract_strided_slice %11 {offsets = [0, 0], sizes = [1, 32], strides = [1, 1]} : vector<4x32xf32> to vector<1x32xf32>
    %13 = vector.extract_strided_slice %11 {offsets = [1, 0], sizes = [1, 32], strides = [1, 1]} : vector<4x32xf32> to vector<1x32xf32>
    %14 = vector.extract_strided_slice %11 {offsets = [2, 0], sizes = [1, 32], strides = [1, 1]} : vector<4x32xf32> to vector<1x32xf32>
    %15 = vector.extract_strided_slice %11 {offsets = [3, 0], sizes = [1, 32], strides = [1, 1]} : vector<4x32xf32> to vector<1x32xf32>
    %cst_11 = arith.constant dense<0.000000e+00> : vector<1x128xf32>
    %16 = tpu.matmul %12, %0, %cst_11 {dimension_numbers = #tpu.dot_dimension_numbers<[1], [0], [0], [1], [0, 0, 1, 1], [], []>} : vector<1x32xf32>, vector<32x128xf32>, vector<1x128xf32> -> vector<1x128xf32>
    %cst_12 = arith.constant dense<0.000000e+00> : vector<1x128xf32>
    %17 = tpu.matmul %14, %2, %cst_12 {dimension_numbers = #tpu.dot_dimension_numbers<[1], [0], [0], [1], [0, 0, 1, 1], [], []>} : vector<1x32xf32>, vector<32x128xf32>, vector<1x128xf32> -> vector<1x128xf32>
    %18 = vector.extract_strided_slice %10 {offsets = [0, 0], sizes = [1, 128], strides = [1, 1]} : vector<8x128xf32> to vector<1x128xf32>
    %19 = arith.addf %18, %16 : vector<1x128xf32>
    %20 = arith.negf %19 : vector<1x128xf32>
    %21 = math.exp %20 : vector<1x128xf32>
    %cst_13 = arith.constant 1.000000e+00 : f32
    %22 = vector.broadcast %cst_13 : f32 to vector<1x128xf32>
    %23 = arith.addf %22, %21 : vector<1x128xf32>
    %24 = arith.divf %22, %23 : vector<1x128xf32>
    %25 = vector.extract_strided_slice %24 {offsets = [0, 0], sizes = [1, 32], strides = [1, 1]} : vector<1x128xf32> to vector<1x32xf32>
    %26 = vector.extract_strided_slice %24 {offsets = [0, 32], sizes = [1, 32], strides = [1, 1]} : vector<1x128xf32> to vector<1x32xf32>
    %27 = vector.extract_strided_slice %24 {offsets = [0, 96], sizes = [1, 32], strides = [1, 1]} : vector<1x128xf32> to vector<1x32xf32>
    %28 = vector.extract_strided_slice %19 {offsets = [0, 64], sizes = [1, 32], strides = [1, 1]} : vector<1x128xf32> to vector<1x32xf32>
    %29 = math.tanh %28 : vector<1x32xf32>
    %30 = arith.mulf %26, %13 : vector<1x32xf32>
    %31 = arith.mulf %25, %29 : vector<1x32xf32>
    %32 = arith.addf %30, %31 : vector<1x32xf32>
    %33 = math.tanh %32 : vector<1x32xf32>
    %34 = arith.mulf %27, %33 : vector<1x32xf32>
    %cst_14 = arith.constant dense<0.000000e+00> : vector<1x128xf32>
    %35 = tpu.matmul %34, %1, %cst_14 {dimension_numbers = #tpu.dot_dimension_numbers<[1], [0], [0], [1], [0, 0, 1, 1], [], []>} : vector<1x32xf32>, vector<32x128xf32>, vector<1x128xf32> -> vector<1x128xf32>
    %36 = arith.addf %35, %17 : vector<1x128xf32>
    %37 = arith.addf %36, %4 : vector<1x128xf32>
    %38 = arith.negf %37 : vector<1x128xf32>
    %39 = math.exp %38 : vector<1x128xf32>
    %cst_15 = arith.constant 1.000000e+00 : f32
    %40 = vector.broadcast %cst_15 : f32 to vector<1x128xf32>
    %41 = arith.addf %40, %39 : vector<1x128xf32>
    %42 = arith.divf %40, %41 : vector<1x128xf32>
    %43 = vector.extract_strided_slice %42 {offsets = [0, 0], sizes = [1, 32], strides = [1, 1]} : vector<1x128xf32> to vector<1x32xf32>
    %44 = vector.extract_strided_slice %42 {offsets = [0, 32], sizes = [1, 32], strides = [1, 1]} : vector<1x128xf32> to vector<1x32xf32>
    %45 = vector.extract_strided_slice %42 {offsets = [0, 96], sizes = [1, 32], strides = [1, 1]} : vector<1x128xf32> to vector<1x32xf32>
    %46 = vector.extract_strided_slice %37 {offsets = [0, 64], sizes = [1, 32], strides = [1, 1]} : vector<1x128xf32> to vector<1x32xf32>
    %47 = math.tanh %46 : vector<1x32xf32>
    %48 = arith.mulf %44, %15 : vector<1x32xf32>
    %49 = arith.mulf %43, %47 : vector<1x32xf32>
    %50 = arith.addf %48, %49 : vector<1x32xf32>
    %51 = math.tanh %50 : vector<1x32xf32>
    %52 = arith.mulf %45, %51 : vector<1x32xf32>
    %cst_16 = arith.constant dense<0.000000e+00> : vector<1x128xf32>
    %53 = tpu.matmul %34, %0, %cst_16 {dimension_numbers = #tpu.dot_dimension_numbers<[1], [0], [0], [1], [0, 0, 1, 1], [], []>} : vector<1x32xf32>, vector<32x128xf32>, vector<1x128xf32> -> vector<1x128xf32>
    %cst_17 = arith.constant dense<0.000000e+00> : vector<1x128xf32>
    %54 = tpu.matmul %52, %2, %cst_17 {dimension_numbers = #tpu.dot_dimension_numbers<[1], [0], [0], [1], [0, 0, 1, 1], [], []>} : vector<1x32xf32>, vector<32x128xf32>, vector<1x128xf32> -> vector<1x128xf32>
    %55 = vector.extract_strided_slice %10 {offsets = [1, 0], sizes = [1, 128], strides = [1, 1]} : vector<8x128xf32> to vector<1x128xf32>
    %56 = arith.addf %55, %53 : vector<1x128xf32>
    %57 = arith.negf %56 : vector<1x128xf32>
    %58 = math.exp %57 : vector<1x128xf32>
    %cst_18 = arith.constant 1.000000e+00 : f32
    %59 = vector.broadcast %cst_18 : f32 to vector<1x128xf32>
    %60 = arith.addf %59, %58 : vector<1x128xf32>
    %61 = arith.divf %59, %60 : vector<1x128xf32>
    %62 = vector.extract_strided_slice %61 {offsets = [0, 0], sizes = [1, 32], strides = [1, 1]} : vector<1x128xf32> to vector<1x32xf32>
    %63 = vector.extract_strided_slice %61 {offsets = [0, 32], sizes = [1, 32], strides = [1, 1]} : vector<1x128xf32> to vector<1x32xf32>
    %64 = vector.extract_strided_slice %61 {offsets = [0, 96], sizes = [1, 32], strides = [1, 1]} : vector<1x128xf32> to vector<1x32xf32>
    %65 = vector.extract_strided_slice %56 {offsets = [0, 64], sizes = [1, 32], strides = [1, 1]} : vector<1x128xf32> to vector<1x32xf32>
    %66 = math.tanh %65 : vector<1x32xf32>
    %67 = arith.mulf %63, %32 : vector<1x32xf32>
    %68 = arith.mulf %62, %66 : vector<1x32xf32>
    %69 = arith.addf %67, %68 : vector<1x32xf32>
    %70 = math.tanh %69 : vector<1x32xf32>
    %71 = arith.mulf %64, %70 : vector<1x32xf32>
    %cst_19 = arith.constant dense<0.000000e+00> : vector<1x128xf32>
    %72 = tpu.matmul %71, %1, %cst_19 {dimension_numbers = #tpu.dot_dimension_numbers<[1], [0], [0], [1], [0, 0, 1, 1], [], []>} : vector<1x32xf32>, vector<32x128xf32>, vector<1x128xf32> -> vector<1x128xf32>
    %73 = arith.addf %72, %54 : vector<1x128xf32>
    %74 = arith.addf %73, %4 : vector<1x128xf32>
    %75 = arith.negf %74 : vector<1x128xf32>
    %76 = math.exp %75 : vector<1x128xf32>
    %cst_20 = arith.constant 1.000000e+00 : f32
    %77 = vector.broadcast %cst_20 : f32 to vector<1x128xf32>
    %78 = arith.addf %77, %76 : vector<1x128xf32>
    %79 = arith.divf %77, %78 : vector<1x128xf32>
    %80 = vector.extract_strided_slice %79 {offsets = [0, 0], sizes = [1, 32], strides = [1, 1]} : vector<1x128xf32> to vector<1x32xf32>
    %81 = vector.extract_strided_slice %79 {offsets = [0, 32], sizes = [1, 32], strides = [1, 1]} : vector<1x128xf32> to vector<1x32xf32>
    %82 = vector.extract_strided_slice %79 {offsets = [0, 96], sizes = [1, 32], strides = [1, 1]} : vector<1x128xf32> to vector<1x32xf32>
    %83 = vector.extract_strided_slice %74 {offsets = [0, 64], sizes = [1, 32], strides = [1, 1]} : vector<1x128xf32> to vector<1x32xf32>
    %84 = math.tanh %83 : vector<1x32xf32>
    %85 = arith.mulf %81, %50 : vector<1x32xf32>
    %86 = arith.mulf %80, %84 : vector<1x32xf32>
    %87 = arith.addf %85, %86 : vector<1x32xf32>
    %88 = math.tanh %87 : vector<1x32xf32>
    %89 = arith.mulf %82, %88 : vector<1x32xf32>
    %cst_21 = arith.constant dense<0.000000e+00> : vector<1x128xf32>
    %90 = tpu.matmul %71, %0, %cst_21 {dimension_numbers = #tpu.dot_dimension_numbers<[1], [0], [0], [1], [0, 0, 1, 1], [], []>} : vector<1x32xf32>, vector<32x128xf32>, vector<1x128xf32> -> vector<1x128xf32>
    %cst_22 = arith.constant dense<0.000000e+00> : vector<1x128xf32>
    %91 = tpu.matmul %89, %2, %cst_22 {dimension_numbers = #tpu.dot_dimension_numbers<[1], [0], [0], [1], [0, 0, 1, 1], [], []>} : vector<1x32xf32>, vector<32x128xf32>, vector<1x128xf32> -> vector<1x128xf32>
    %92 = vector.extract_strided_slice %10 {offsets = [2, 0], sizes = [1, 128], strides = [1, 1]} : vector<8x128xf32> to vector<1x128xf32>
    %93 = arith.addf %92, %90 : vector<1x128xf32>
    %94 = arith.negf %93 : vector<1x128xf32>
    %95 = math.exp %94 : vector<1x128xf32>
    %cst_23 = arith.constant 1.000000e+00 : f32
    %96 = vector.broadcast %cst_23 : f32 to vector<1x128xf32>
    %97 = arith.addf %96, %95 : vector<1x128xf32>
    %98 = arith.divf %96, %97 : vector<1x128xf32>
    %99 = vector.extract_strided_slice %98 {offsets = [0, 0], sizes = [1, 32], strides = [1, 1]} : vector<1x128xf32> to vector<1x32xf32>
    %100 = vector.extract_strided_slice %98 {offsets = [0, 32], sizes = [1, 32], strides = [1, 1]} : vector<1x128xf32> to vector<1x32xf32>
    %101 = vector.extract_strided_slice %98 {offsets = [0, 96], sizes = [1, 32], strides = [1, 1]} : vector<1x128xf32> to vector<1x32xf32>
    %102 = vector.extract_strided_slice %93 {offsets = [0, 64], sizes = [1, 32], strides = [1, 1]} : vector<1x128xf32> to vector<1x32xf32>
    %103 = math.tanh %102 : vector<1x32xf32>
    %104 = arith.mulf %100, %69 : vector<1x32xf32>
    %105 = arith.mulf %99, %103 : vector<1x32xf32>
    %106 = arith.addf %104, %105 : vector<1x32xf32>
    %107 = math.tanh %106 : vector<1x32xf32>
    %108 = arith.mulf %101, %107 : vector<1x32xf32>
    %cst_24 = arith.constant dense<0.000000e+00> : vector<1x128xf32>
    %109 = tpu.matmul %108, %1, %cst_24 {dimension_numbers = #tpu.dot_dimension_numbers<[1], [0], [0], [1], [0, 0, 1, 1], [], []>} : vector<1x32xf32>, vector<32x128xf32>, vector<1x128xf32> -> vector<1x128xf32>
    %110 = arith.addf %109, %91 : vector<1x128xf32>
    %111 = arith.addf %110, %4 : vector<1x128xf32>
    %112 = arith.negf %111 : vector<1x128xf32>
    %113 = math.exp %112 : vector<1x128xf32>
    %cst_25 = arith.constant 1.000000e+00 : f32
    %114 = vector.broadcast %cst_25 : f32 to vector<1x128xf32>
    %115 = arith.addf %114, %113 : vector<1x128xf32>
    %116 = arith.divf %114, %115 : vector<1x128xf32>
    %117 = vector.extract_strided_slice %116 {offsets = [0, 0], sizes = [1, 32], strides = [1, 1]} : vector<1x128xf32> to vector<1x32xf32>
    %118 = vector.extract_strided_slice %116 {offsets = [0, 32], sizes = [1, 32], strides = [1, 1]} : vector<1x128xf32> to vector<1x32xf32>
    %119 = vector.extract_strided_slice %116 {offsets = [0, 96], sizes = [1, 32], strides = [1, 1]} : vector<1x128xf32> to vector<1x32xf32>
    %120 = vector.extract_strided_slice %111 {offsets = [0, 64], sizes = [1, 32], strides = [1, 1]} : vector<1x128xf32> to vector<1x32xf32>
    %121 = math.tanh %120 : vector<1x32xf32>
    %122 = arith.mulf %118, %87 : vector<1x32xf32>
    %123 = arith.mulf %117, %121 : vector<1x32xf32>
    %124 = arith.addf %122, %123 : vector<1x32xf32>
    %125 = math.tanh %124 : vector<1x32xf32>
    %126 = arith.mulf %119, %125 : vector<1x32xf32>
    %cst_26 = arith.constant dense<0.000000e+00> : vector<1x128xf32>
    %127 = tpu.matmul %108, %0, %cst_26 {dimension_numbers = #tpu.dot_dimension_numbers<[1], [0], [0], [1], [0, 0, 1, 1], [], []>} : vector<1x32xf32>, vector<32x128xf32>, vector<1x128xf32> -> vector<1x128xf32>
    %cst_27 = arith.constant dense<0.000000e+00> : vector<1x128xf32>
    %128 = tpu.matmul %126, %2, %cst_27 {dimension_numbers = #tpu.dot_dimension_numbers<[1], [0], [0], [1], [0, 0, 1, 1], [], []>} : vector<1x32xf32>, vector<32x128xf32>, vector<1x128xf32> -> vector<1x128xf32>
    %129 = vector.extract_strided_slice %10 {offsets = [3, 0], sizes = [1, 128], strides = [1, 1]} : vector<8x128xf32> to vector<1x128xf32>
    %130 = arith.addf %129, %127 : vector<1x128xf32>
    %131 = arith.negf %130 : vector<1x128xf32>
    %132 = math.exp %131 : vector<1x128xf32>
    %cst_28 = arith.constant 1.000000e+00 : f32
    %133 = vector.broadcast %cst_28 : f32 to vector<1x128xf32>
    %134 = arith.addf %133, %132 : vector<1x128xf32>
    %135 = arith.divf %133, %134 : vector<1x128xf32>
    %136 = vector.extract_strided_slice %135 {offsets = [0, 0], sizes = [1, 32], strides = [1, 1]} : vector<1x128xf32> to vector<1x32xf32>
    %137 = vector.extract_strided_slice %135 {offsets = [0, 32], sizes = [1, 32], strides = [1, 1]} : vector<1x128xf32> to vector<1x32xf32>
    %138 = vector.extract_strided_slice %135 {offsets = [0, 96], sizes = [1, 32], strides = [1, 1]} : vector<1x128xf32> to vector<1x32xf32>
    %139 = vector.extract_strided_slice %130 {offsets = [0, 64], sizes = [1, 32], strides = [1, 1]} : vector<1x128xf32> to vector<1x32xf32>
    %140 = math.tanh %139 : vector<1x32xf32>
    %141 = arith.mulf %137, %106 : vector<1x32xf32>
    %142 = arith.mulf %136, %140 : vector<1x32xf32>
    %143 = arith.addf %141, %142 : vector<1x32xf32>
    %144 = math.tanh %143 : vector<1x32xf32>
    %145 = arith.mulf %138, %144 : vector<1x32xf32>
    %cst_29 = arith.constant dense<0.000000e+00> : vector<1x128xf32>
    %146 = tpu.matmul %145, %1, %cst_29 {dimension_numbers = #tpu.dot_dimension_numbers<[1], [0], [0], [1], [0, 0, 1, 1], [], []>} : vector<1x32xf32>, vector<32x128xf32>, vector<1x128xf32> -> vector<1x128xf32>
    %147 = arith.addf %146, %128 : vector<1x128xf32>
    %148 = arith.addf %147, %4 : vector<1x128xf32>
    %149 = arith.negf %148 : vector<1x128xf32>
    %150 = math.exp %149 : vector<1x128xf32>
    %cst_30 = arith.constant 1.000000e+00 : f32
    %151 = vector.broadcast %cst_30 : f32 to vector<1x128xf32>
    %152 = arith.addf %151, %150 : vector<1x128xf32>
    %153 = arith.divf %151, %152 : vector<1x128xf32>
    %154 = vector.extract_strided_slice %153 {offsets = [0, 0], sizes = [1, 32], strides = [1, 1]} : vector<1x128xf32> to vector<1x32xf32>
    %155 = vector.extract_strided_slice %153 {offsets = [0, 32], sizes = [1, 32], strides = [1, 1]} : vector<1x128xf32> to vector<1x32xf32>
    %156 = vector.extract_strided_slice %153 {offsets = [0, 96], sizes = [1, 32], strides = [1, 1]} : vector<1x128xf32> to vector<1x32xf32>
    %157 = vector.extract_strided_slice %148 {offsets = [0, 64], sizes = [1, 32], strides = [1, 1]} : vector<1x128xf32> to vector<1x32xf32>
    %158 = math.tanh %157 : vector<1x32xf32>
    %159 = arith.mulf %155, %124 : vector<1x32xf32>
    %160 = arith.mulf %154, %158 : vector<1x32xf32>
    %161 = arith.addf %159, %160 : vector<1x32xf32>
    %162 = math.tanh %161 : vector<1x32xf32>
    %163 = arith.mulf %156, %162 : vector<1x32xf32>
    %cst_31 = arith.constant dense<0.000000e+00> : vector<1x128xf32>
    %164 = tpu.matmul %145, %0, %cst_31 {dimension_numbers = #tpu.dot_dimension_numbers<[1], [0], [0], [1], [0, 0, 1, 1], [], []>} : vector<1x32xf32>, vector<32x128xf32>, vector<1x128xf32> -> vector<1x128xf32>
    %cst_32 = arith.constant dense<0.000000e+00> : vector<1x128xf32>
    %165 = tpu.matmul %163, %2, %cst_32 {dimension_numbers = #tpu.dot_dimension_numbers<[1], [0], [0], [1], [0, 0, 1, 1], [], []>} : vector<1x32xf32>, vector<32x128xf32>, vector<1x128xf32> -> vector<1x128xf32>
    %166 = vector.extract_strided_slice %10 {offsets = [4, 0], sizes = [1, 128], strides = [1, 1]} : vector<8x128xf32> to vector<1x128xf32>
    %167 = arith.addf %166, %164 : vector<1x128xf32>
    %168 = arith.negf %167 : vector<1x128xf32>
    %169 = math.exp %168 : vector<1x128xf32>
    %cst_33 = arith.constant 1.000000e+00 : f32
    %170 = vector.broadcast %cst_33 : f32 to vector<1x128xf32>
    %171 = arith.addf %170, %169 : vector<1x128xf32>
    %172 = arith.divf %170, %171 : vector<1x128xf32>
    %173 = vector.extract_strided_slice %172 {offsets = [0, 0], sizes = [1, 32], strides = [1, 1]} : vector<1x128xf32> to vector<1x32xf32>
    %174 = vector.extract_strided_slice %172 {offsets = [0, 32], sizes = [1, 32], strides = [1, 1]} : vector<1x128xf32> to vector<1x32xf32>
    %175 = vector.extract_strided_slice %172 {offsets = [0, 96], sizes = [1, 32], strides = [1, 1]} : vector<1x128xf32> to vector<1x32xf32>
    %176 = vector.extract_strided_slice %167 {offsets = [0, 64], sizes = [1, 32], strides = [1, 1]} : vector<1x128xf32> to vector<1x32xf32>
    %177 = math.tanh %176 : vector<1x32xf32>
    %178 = arith.mulf %174, %143 : vector<1x32xf32>
    %179 = arith.mulf %173, %177 : vector<1x32xf32>
    %180 = arith.addf %178, %179 : vector<1x32xf32>
    %181 = math.tanh %180 : vector<1x32xf32>
    %182 = arith.mulf %175, %181 : vector<1x32xf32>
    %cst_34 = arith.constant dense<0.000000e+00> : vector<1x128xf32>
    %183 = tpu.matmul %182, %1, %cst_34 {dimension_numbers = #tpu.dot_dimension_numbers<[1], [0], [0], [1], [0, 0, 1, 1], [], []>} : vector<1x32xf32>, vector<32x128xf32>, vector<1x128xf32> -> vector<1x128xf32>
    %184 = arith.addf %183, %165 : vector<1x128xf32>
    %185 = arith.addf %184, %4 : vector<1x128xf32>
    %186 = arith.negf %185 : vector<1x128xf32>
    %187 = math.exp %186 : vector<1x128xf32>
    %cst_35 = arith.constant 1.000000e+00 : f32
    %188 = vector.broadcast %cst_35 : f32 to vector<1x128xf32>
    %189 = arith.addf %188, %187 : vector<1x128xf32>
    %190 = arith.divf %188, %189 : vector<1x128xf32>
    %191 = vector.extract_strided_slice %190 {offsets = [0, 0], sizes = [1, 32], strides = [1, 1]} : vector<1x128xf32> to vector<1x32xf32>
    %192 = vector.extract_strided_slice %190 {offsets = [0, 32], sizes = [1, 32], strides = [1, 1]} : vector<1x128xf32> to vector<1x32xf32>
    %193 = vector.extract_strided_slice %190 {offsets = [0, 96], sizes = [1, 32], strides = [1, 1]} : vector<1x128xf32> to vector<1x32xf32>
    %194 = vector.extract_strided_slice %185 {offsets = [0, 64], sizes = [1, 32], strides = [1, 1]} : vector<1x128xf32> to vector<1x32xf32>
    %195 = math.tanh %194 : vector<1x32xf32>
    %196 = arith.mulf %192, %161 : vector<1x32xf32>
    %197 = arith.mulf %191, %195 : vector<1x32xf32>
    %198 = arith.addf %196, %197 : vector<1x32xf32>
    %199 = math.tanh %198 : vector<1x32xf32>
    %200 = arith.mulf %193, %199 : vector<1x32xf32>
    %cst_36 = arith.constant dense<0.000000e+00> : vector<1x128xf32>
    %201 = tpu.matmul %182, %0, %cst_36 {dimension_numbers = #tpu.dot_dimension_numbers<[1], [0], [0], [1], [0, 0, 1, 1], [], []>} : vector<1x32xf32>, vector<32x128xf32>, vector<1x128xf32> -> vector<1x128xf32>
    %cst_37 = arith.constant dense<0.000000e+00> : vector<1x128xf32>
    %202 = tpu.matmul %200, %2, %cst_37 {dimension_numbers = #tpu.dot_dimension_numbers<[1], [0], [0], [1], [0, 0, 1, 1], [], []>} : vector<1x32xf32>, vector<32x128xf32>, vector<1x128xf32> -> vector<1x128xf32>
    %203 = vector.extract_strided_slice %10 {offsets = [5, 0], sizes = [1, 128], strides = [1, 1]} : vector<8x128xf32> to vector<1x128xf32>
    %204 = arith.addf %203, %201 : vector<1x128xf32>
    %205 = arith.negf %204 : vector<1x128xf32>
    %206 = math.exp %205 : vector<1x128xf32>
    %cst_38 = arith.constant 1.000000e+00 : f32
    %207 = vector.broadcast %cst_38 : f32 to vector<1x128xf32>
    %208 = arith.addf %207, %206 : vector<1x128xf32>
    %209 = arith.divf %207, %208 : vector<1x128xf32>
    %210 = vector.extract_strided_slice %209 {offsets = [0, 0], sizes = [1, 32], strides = [1, 1]} : vector<1x128xf32> to vector<1x32xf32>
    %211 = vector.extract_strided_slice %209 {offsets = [0, 32], sizes = [1, 32], strides = [1, 1]} : vector<1x128xf32> to vector<1x32xf32>
    %212 = vector.extract_strided_slice %209 {offsets = [0, 96], sizes = [1, 32], strides = [1, 1]} : vector<1x128xf32> to vector<1x32xf32>
    %213 = vector.extract_strided_slice %204 {offsets = [0, 64], sizes = [1, 32], strides = [1, 1]} : vector<1x128xf32> to vector<1x32xf32>
    %214 = math.tanh %213 : vector<1x32xf32>
    %215 = arith.mulf %211, %180 : vector<1x32xf32>
    %216 = arith.mulf %210, %214 : vector<1x32xf32>
    %217 = arith.addf %215, %216 : vector<1x32xf32>
    %218 = math.tanh %217 : vector<1x32xf32>
    %219 = arith.mulf %212, %218 : vector<1x32xf32>
    %cst_39 = arith.constant dense<0.000000e+00> : vector<1x128xf32>
    %220 = tpu.matmul %219, %1, %cst_39 {dimension_numbers = #tpu.dot_dimension_numbers<[1], [0], [0], [1], [0, 0, 1, 1], [], []>} : vector<1x32xf32>, vector<32x128xf32>, vector<1x128xf32> -> vector<1x128xf32>
    %221 = arith.addf %220, %202 : vector<1x128xf32>
    %222 = arith.addf %221, %4 : vector<1x128xf32>
    %223 = arith.negf %222 : vector<1x128xf32>
    %224 = math.exp %223 : vector<1x128xf32>
    %cst_40 = arith.constant 1.000000e+00 : f32
    %225 = vector.broadcast %cst_40 : f32 to vector<1x128xf32>
    %226 = arith.addf %225, %224 : vector<1x128xf32>
    %227 = arith.divf %225, %226 : vector<1x128xf32>
    %228 = vector.extract_strided_slice %227 {offsets = [0, 0], sizes = [1, 32], strides = [1, 1]} : vector<1x128xf32> to vector<1x32xf32>
    %229 = vector.extract_strided_slice %227 {offsets = [0, 32], sizes = [1, 32], strides = [1, 1]} : vector<1x128xf32> to vector<1x32xf32>
    %230 = vector.extract_strided_slice %227 {offsets = [0, 96], sizes = [1, 32], strides = [1, 1]} : vector<1x128xf32> to vector<1x32xf32>
    %231 = vector.extract_strided_slice %222 {offsets = [0, 64], sizes = [1, 32], strides = [1, 1]} : vector<1x128xf32> to vector<1x32xf32>
    %232 = math.tanh %231 : vector<1x32xf32>
    %233 = arith.mulf %229, %198 : vector<1x32xf32>
    %234 = arith.mulf %228, %232 : vector<1x32xf32>
    %235 = arith.addf %233, %234 : vector<1x32xf32>
    %236 = math.tanh %235 : vector<1x32xf32>
    %237 = arith.mulf %230, %236 : vector<1x32xf32>
    %cst_41 = arith.constant dense<0.000000e+00> : vector<1x128xf32>
    %238 = tpu.matmul %219, %0, %cst_41 {dimension_numbers = #tpu.dot_dimension_numbers<[1], [0], [0], [1], [0, 0, 1, 1], [], []>} : vector<1x32xf32>, vector<32x128xf32>, vector<1x128xf32> -> vector<1x128xf32>
    %cst_42 = arith.constant dense<0.000000e+00> : vector<1x128xf32>
    %239 = tpu.matmul %237, %2, %cst_42 {dimension_numbers = #tpu.dot_dimension_numbers<[1], [0], [0], [1], [0, 0, 1, 1], [], []>} : vector<1x32xf32>, vector<32x128xf32>, vector<1x128xf32> -> vector<1x128xf32>
    %240 = vector.extract_strided_slice %10 {offsets = [6, 0], sizes = [1, 128], strides = [1, 1]} : vector<8x128xf32> to vector<1x128xf32>
    %241 = arith.addf %240, %238 : vector<1x128xf32>
    %242 = arith.negf %241 : vector<1x128xf32>
    %243 = math.exp %242 : vector<1x128xf32>
    %cst_43 = arith.constant 1.000000e+00 : f32
    %244 = vector.broadcast %cst_43 : f32 to vector<1x128xf32>
    %245 = arith.addf %244, %243 : vector<1x128xf32>
    %246 = arith.divf %244, %245 : vector<1x128xf32>
    %247 = vector.extract_strided_slice %246 {offsets = [0, 0], sizes = [1, 32], strides = [1, 1]} : vector<1x128xf32> to vector<1x32xf32>
    %248 = vector.extract_strided_slice %246 {offsets = [0, 32], sizes = [1, 32], strides = [1, 1]} : vector<1x128xf32> to vector<1x32xf32>
    %249 = vector.extract_strided_slice %246 {offsets = [0, 96], sizes = [1, 32], strides = [1, 1]} : vector<1x128xf32> to vector<1x32xf32>
    %250 = vector.extract_strided_slice %241 {offsets = [0, 64], sizes = [1, 32], strides = [1, 1]} : vector<1x128xf32> to vector<1x32xf32>
    %251 = math.tanh %250 : vector<1x32xf32>
    %252 = arith.mulf %248, %217 : vector<1x32xf32>
    %253 = arith.mulf %247, %251 : vector<1x32xf32>
    %254 = arith.addf %252, %253 : vector<1x32xf32>
    %255 = math.tanh %254 : vector<1x32xf32>
    %256 = arith.mulf %249, %255 : vector<1x32xf32>
    %cst_44 = arith.constant dense<0.000000e+00> : vector<1x128xf32>
    %257 = tpu.matmul %256, %1, %cst_44 {dimension_numbers = #tpu.dot_dimension_numbers<[1], [0], [0], [1], [0, 0, 1, 1], [], []>} : vector<1x32xf32>, vector<32x128xf32>, vector<1x128xf32> -> vector<1x128xf32>
    %258 = arith.addf %257, %239 : vector<1x128xf32>
    %259 = arith.addf %258, %4 : vector<1x128xf32>
    %260 = arith.negf %259 : vector<1x128xf32>
    %261 = math.exp %260 : vector<1x128xf32>
    %cst_45 = arith.constant 1.000000e+00 : f32
    %262 = vector.broadcast %cst_45 : f32 to vector<1x128xf32>
    %263 = arith.addf %262, %261 : vector<1x128xf32>
    %264 = arith.divf %262, %263 : vector<1x128xf32>
    %265 = vector.extract_strided_slice %264 {offsets = [0, 0], sizes = [1, 32], strides = [1, 1]} : vector<1x128xf32> to vector<1x32xf32>
    %266 = vector.extract_strided_slice %264 {offsets = [0, 32], sizes = [1, 32], strides = [1, 1]} : vector<1x128xf32> to vector<1x32xf32>
    %267 = vector.extract_strided_slice %264 {offsets = [0, 96], sizes = [1, 32], strides = [1, 1]} : vector<1x128xf32> to vector<1x32xf32>
    %268 = vector.extract_strided_slice %259 {offsets = [0, 64], sizes = [1, 32], strides = [1, 1]} : vector<1x128xf32> to vector<1x32xf32>
    %269 = math.tanh %268 : vector<1x32xf32>
    %270 = arith.mulf %266, %235 : vector<1x32xf32>
    %271 = arith.mulf %265, %269 : vector<1x32xf32>
    %272 = arith.addf %270, %271 : vector<1x32xf32>
    %273 = math.tanh %272 : vector<1x32xf32>
    %274 = arith.mulf %267, %273 : vector<1x32xf32>
    %cst_46 = arith.constant dense<0.000000e+00> : vector<1x128xf32>
    %275 = tpu.matmul %256, %0, %cst_46 {dimension_numbers = #tpu.dot_dimension_numbers<[1], [0], [0], [1], [0, 0, 1, 1], [], []>} : vector<1x32xf32>, vector<32x128xf32>, vector<1x128xf32> -> vector<1x128xf32>
    %cst_47 = arith.constant dense<0.000000e+00> : vector<1x128xf32>
    %276 = tpu.matmul %274, %2, %cst_47 {dimension_numbers = #tpu.dot_dimension_numbers<[1], [0], [0], [1], [0, 0, 1, 1], [], []>} : vector<1x32xf32>, vector<32x128xf32>, vector<1x128xf32> -> vector<1x128xf32>
    %277 = vector.extract_strided_slice %10 {offsets = [7, 0], sizes = [1, 128], strides = [1, 1]} : vector<8x128xf32> to vector<1x128xf32>
    %278 = arith.addf %277, %275 : vector<1x128xf32>
    %279 = arith.negf %278 : vector<1x128xf32>
    %280 = math.exp %279 : vector<1x128xf32>
    %cst_48 = arith.constant 1.000000e+00 : f32
    %281 = vector.broadcast %cst_48 : f32 to vector<1x128xf32>
    %282 = arith.addf %281, %280 : vector<1x128xf32>
    %283 = arith.divf %281, %282 : vector<1x128xf32>
    %284 = vector.extract_strided_slice %283 {offsets = [0, 0], sizes = [1, 32], strides = [1, 1]} : vector<1x128xf32> to vector<1x32xf32>
    %285 = vector.extract_strided_slice %283 {offsets = [0, 32], sizes = [1, 32], strides = [1, 1]} : vector<1x128xf32> to vector<1x32xf32>
    %286 = vector.extract_strided_slice %283 {offsets = [0, 96], sizes = [1, 32], strides = [1, 1]} : vector<1x128xf32> to vector<1x32xf32>
    %287 = vector.extract_strided_slice %278 {offsets = [0, 64], sizes = [1, 32], strides = [1, 1]} : vector<1x128xf32> to vector<1x32xf32>
    %288 = math.tanh %287 : vector<1x32xf32>
    %289 = arith.mulf %285, %254 : vector<1x32xf32>
    %290 = arith.mulf %284, %288 : vector<1x32xf32>
    %291 = arith.addf %289, %290 : vector<1x32xf32>
    %292 = math.tanh %291 : vector<1x32xf32>
    %293 = arith.mulf %286, %292 : vector<1x32xf32>
    %cst_49 = arith.constant dense<0.000000e+00> : vector<1x128xf32>
    %294 = tpu.matmul %293, %1, %cst_49 {dimension_numbers = #tpu.dot_dimension_numbers<[1], [0], [0], [1], [0, 0, 1, 1], [], []>} : vector<1x32xf32>, vector<32x128xf32>, vector<1x128xf32> -> vector<1x128xf32>
    %295 = arith.addf %294, %276 : vector<1x128xf32>
    %296 = arith.addf %295, %4 : vector<1x128xf32>
    %297 = arith.negf %296 : vector<1x128xf32>
    %298 = math.exp %297 : vector<1x128xf32>
    %cst_50 = arith.constant 1.000000e+00 : f32
    %299 = vector.broadcast %cst_50 : f32 to vector<1x128xf32>
    %300 = arith.addf %299, %298 : vector<1x128xf32>
    %301 = arith.divf %299, %300 : vector<1x128xf32>
    %302 = vector.extract_strided_slice %301 {offsets = [0, 0], sizes = [1, 32], strides = [1, 1]} : vector<1x128xf32> to vector<1x32xf32>
    %303 = vector.extract_strided_slice %301 {offsets = [0, 32], sizes = [1, 32], strides = [1, 1]} : vector<1x128xf32> to vector<1x32xf32>
    %304 = vector.extract_strided_slice %301 {offsets = [0, 96], sizes = [1, 32], strides = [1, 1]} : vector<1x128xf32> to vector<1x32xf32>
    %305 = vector.extract_strided_slice %296 {offsets = [0, 64], sizes = [1, 32], strides = [1, 1]} : vector<1x128xf32> to vector<1x32xf32>
    %306 = math.tanh %305 : vector<1x32xf32>
    %307 = arith.mulf %303, %272 : vector<1x32xf32>
    %308 = arith.mulf %302, %306 : vector<1x32xf32>
    %309 = arith.addf %307, %308 : vector<1x32xf32>
    %310 = math.tanh %309 : vector<1x32xf32>
    %311 = arith.mulf %304, %310 : vector<1x32xf32>
    %312 = tpu.concatenate %52, %89, %126, %163, %200, %237, %274, %311 in 0 : vector<1x32xf32>, vector<1x32xf32>, vector<1x32xf32>, vector<1x32xf32>, vector<1x32xf32>, vector<1x32xf32>, vector<1x32xf32>, vector<1x32xf32> -> vector<8x32xf32>
    %c0_51 = arith.constant 0 : index
    %c0_52 = arith.constant 0 : index
    %313 = vector.load %arg4[%c0_51, %c0_52] : memref<33x32xf32, #tpu.memory_space<vmem>>, vector<33x32xf32>
    %314 = vector.extract_strided_slice %313 {offsets = [0, 0], sizes = [32, 32], strides = [1, 1]} : vector<33x32xf32> to vector<32x32xf32>
    %cst_53 = arith.constant dense<0.000000e+00> : vector<8x32xf32>
    %315 = tpu.matmul %312, %314, %cst_53 {dimension_numbers = #tpu.dot_dimension_numbers<[1], [0], [0], [1], [0, 0, 1, 1], [], []>} : vector<8x32xf32>, vector<32x32xf32>, vector<8x32xf32> -> vector<8x32xf32>
    %316 = vector.extract_strided_slice %313 {offsets = [32, 0], sizes = [1, 32], strides = [1, 1]} : vector<33x32xf32> to vector<1x32xf32>
    %317 = vector.broadcast %316 : vector<1x32xf32> to vector<8x32xf32>
    %318 = arith.addf %315, %317 : vector<8x32xf32>
    %cst_54 = arith.constant dense<0xFF800000> : vector<8xf32>
    %319 = vector.multi_reduction <maximumf>, %318, %cst_54 [1] : vector<8x32xf32> to vector<8xf32>
    %320 = vector.shape_cast %319 : vector<8xf32> to vector<8x1xf32>
    %321 = vector.broadcast %320 : vector<8x1xf32> to vector<8x32xf32>
    %322 = arith.subf %318, %321 : vector<8x32xf32>
    %323 = math.exp %322 : vector<8x32xf32>
    %cst_55 = arith.constant dense<0.000000e+00> : vector<8xf32>
    %324 = vector.multi_reduction <add>, %323, %cst_55 [1] : vector<8x32xf32> to vector<8xf32>
    %325 = vector.shape_cast %324 : vector<8xf32> to vector<8x1xf32>
    %326 = math.log %325 : vector<8x1xf32>
    %327 = arith.addf %320, %326 : vector<8x1xf32>
    %328 = vector.broadcast %327 : vector<8x1xf32> to vector<8x32xf32>
    %329 = arith.subf %318, %328 : vector<8x32xf32>
    %c0_56 = arith.constant 0 : index
    %c0_57 = arith.constant 0 : index
    %330 = vector.load %arg6[%c0_56, %c0_57] : memref<8x32xf32, #tpu.memory_space<vmem>>, vector<8x32xf32>
    tpu.vector_store %arg6[%c0_56, %c0_57], %329 {strides = array<i32>} : memref<8x32xf32, #tpu.memory_space<vmem>>, vector<8x32xf32>,
    return
  }
}

</mosaic_0001>

<llo_original>
// kernel: lstm_forward.1
$region0: #{lstm_forward.1}
  #allocation0 [shape = 'u32[]', space=smem, size = 0x4, offset = 0x4, fixed_abs, tag = 'smem constant byte address 0x4 - core index']
  #allocation1 [shape = 'u32[144,128]{1,0:T(1,128)}', space=vmem, size = 0x12000, scoped, tag = 'internal scratch']
  %s0 = inlined_call_operand.vmem [shape: f32[8,32], index: 0, kind: input, shape index: {}]
  %s1 = inlined_call_operand.vmem [shape: f32[32,128], index: 1, kind: input, shape index: {}]
  %s2 = inlined_call_operand.vmem [shape: f32[96,128], index: 2, kind: input, shape index: {}]
  %s3 = inlined_call_operand.vmem [shape: f32[2,128], index: 3, kind: input, shape index: {}]
  %s4 = inlined_call_operand.vmem [shape: f32[33,32], index: 4, kind: input, shape index: {}]
  %s5 = inlined_call_operand.vmem [shape: f32[4,32], index: 5, kind: input, shape index: {}]
  %s6 = inlined_call_operand.hbm [shape: f32[8,32], index: 6, kind: output, shape index: {}]
  %s7 = sld [smem:[#allocation0]]
  $region34: #{lstm_forward.1} parent=0
    _
  %s9 = ssub.s32 1, %s7
  %s10 = scalar_select 0, %s9, %s7
  $region1: #{lstm_forward.1} parent=0
    #allocation2 [shape = 'u8[4096]{0}', space=vmem, size = 0x1000, scoped, tag = 'output window, operand 0, single buffered']
    #allocation3 [shape = 's32[1]{0}', space=sflag, size = 0x4, scoped, tag = 'scoped memory for lstm_forward.1']
    %11 = vsyncpa [#allocation3], 0
    // Predicated region
    $region2: #{lstm_forward.1} parent=1 // pred_check
      _
    $region3: #{lstm_forward.1} parent=1 // pred_check_branch
      %13 = sbr.rel (0) target = $region5
    $region4: #{lstm_forward.1} parent=1 // pred_region
      _
    $region5: #{lstm_forward.1} parent=1 // pred_fallthru
      _
    // Predicated region
    $region6: #{lstm_forward.1} parent=1 // pred_check
      _
    $region7: #{lstm_forward.1} parent=1 // pred_check_branch
      %15 = sbr.rel (0) target = $region9
    $region8: #{lstm_forward.1} parent=1 // pred_region
      _
    $region9: #{lstm_forward.1} parent=1 // pred_fallthru
      _
    // Predicated region
    $region10: #{lstm_forward.1} parent=1 // pred_check
      _
    $region11: #{lstm_forward.1} parent=1 // pred_check_branch
      %17 = sbr.rel (0) target = $region13
    $region12: #{lstm_forward.1} parent=1 // pred_region
      _
    $region13: #{lstm_forward.1} parent=1 // pred_fallthru
      _
    // Predicated region
    $region14: #{lstm_forward.1} parent=1 // pred_check
      _
    $region15: #{lstm_forward.1} parent=1 // pred_check_branch
      %19 = sbr.rel (0) target = $region17
    $region16: #{lstm_forward.1} parent=1 // pred_region
      _
    $region17: #{lstm_forward.1} parent=1 // pred_fallthru
      _
    // Predicated region
    $region18: #{lstm_forward.1} parent=1 // pred_check
      _
    $region19: #{lstm_forward.1} parent=1 // pred_check_branch
      %21 = sbr.rel (0) target = $region21
    $region20: #{lstm_forward.1} parent=1 // pred_region
      _
    $region21: #{lstm_forward.1} parent=1 // pred_fallthru
      _
    // Predicated region
    $region22: #{lstm_forward.1} parent=1 // pred_check
      _
    $region23: #{lstm_forward.1} parent=1 // pred_check_branch
      %23 = sbr.rel (0) target = $region25
    $region24: #{lstm_forward.1} parent=1 // pred_region
      _
    $region25: #{lstm_forward.1} parent=1 // pred_fallthru
      _
    %v24 = vld [vmem:[%s2] sm:$0xff]
    %v25 = vld [vmem:[%s2 + $0x8] sm:$0xff]
    %v26 = vld [vmem:[%s2 + $0x10] sm:$0xff]
    %v27 = vld [vmem:[%s2 + $0x18] sm:$0xff]
    %v28 = vld [vmem:[%s2 + $0x20] sm:$0xff]
    %v29 = vld [vmem:[%s2 + $0x28] sm:$0xff]
    %v30 = vld [vmem:[%s2 + $0x30] sm:$0xff]
    %v31 = vld [vmem:[%s2 + $0x38] sm:$0xff]
    %v32 = vld [vmem:[%s2 + $0x40] sm:$0xff]
    %v33 = vld [vmem:[%s2 + $0x48] sm:$0xff]
    %v34 = vld [vmem:[%s2 + $0x50] sm:$0xff]
    %v35 = vld [vmem:[%s2 + $0x58] sm:$0xff]
    %v36 = vld [vmem:[%s3] sm:$0x3]
    %v37 = vld [vmem:[%s0] sm:$0xff]
    %v38 = vld [vmem:[%s1] sm:$0xff]
    %v39 = vld [vmem:[%s1 + $0x8] sm:$0xff]
    %v40 = vld [vmem:[%s1 + $0x10] sm:$0xff]
    %v41 = vld [vmem:[%s1 + $0x18] sm:$0xff]
    %v42 = vlaneseq
    %v43 = vshrl.u32 %v42, 7
    %v44 = vsub.s32 0, %v43
    %v45 = vrot.slane %v36, %v44
    %vm46 = vcmask 261120
    %v48 = vsel %vm46, %v37, 0
    %50 = vmatprep.subr.mxu0 0.0
    %51 = vmatpush1.msra.mxu0 %v38
    %52 = vmatprep.subr.mxu0 0.0
    %53 = vmatpush1.msra.mxu0 %v39
    %54 = vmatprep.subr.mxu0 0.0
    %55 = vmatpush1.msra.mxu0 %v40
    %56 = vmatprep.subr.mxu0 0.0
    %57 = vmatpush1.msra.mxu0 %v41
    %58 = vmatprep.subr.mxu0 0.0
    %59 = vmatpush1.msra.mxu0 0.0
    %60 = vmatprep.subr.mxu0 0.0
    %61 = vmatpush1.msra.mxu0 0.0
    %62 = vmatprep.subr.mxu0 0.0
    %63 = vmatpush1.msra.mxu0 0.0
    %64 = vmatprep.subr.mxu0 0.0
    %65 = vmatpush1.msra.mxu0 0.0
    %66 = vmatprep.subr.mxu0 0.0
    %67 = vmatpush1.msra.mxu0 0.0
    %68 = vmatprep.subr.mxu0 0.0
    %69 = vmatpush1.msra.mxu0 0.0
    %70 = vmatprep.subr.mxu0 0.0
    %71 = vmatpush1.msra.mxu0 0.0
    %72 = vmatprep.subr.mxu0 0.0
    %73 = vmatpush1.msra.mxu0 0.0
    %74 = vmatprep.subr.mxu0 0.0
    %75 = vmatpush1.msra.mxu0 0.0
    %76 = vmatprep.subr.mxu0 0.0
    %77 = vmatpush1.msra.mxu0 0.0
    %78 = vmatprep.subr.mxu0 0.0
    %79 = vmatpush1.msra.mxu0 0.0
    %80 = vmatprep.subr.mxu0 0.0
    %81 = vmatpush1.msra.mxu0 0.0
    %82 = vmatprep.subr.mxu0 0.0
    %83 = vmatpush1.msra.mxu0 0.0
    %84 = vmatprep.subr.mxu0 0.0
    %85 = vmatpush1.msra.mxu0 0.0
    %86 = vmatprep.subr.mxu0 0.0
    %87 = vmatpush1.msra.mxu0 0.0
    %88 = vmatprep.subr.mxu0 0.0
    %89 = vmatpush1.msra.mxu0 0.0
    %90 = vmatprep.subr.mxu0 0.0
    %91 = vmatpush1.msra.mxu0 0.0
    %92 = vmatprep.subr.mxu0 0.0
    %93 = vmatpush1.msra.mxu0 0.0
    %94 = vmatprep.subr.mxu0 0.0
    %95 = vmatpush1.msra.mxu0 0.0
    %96 = vmatprep.subr.mxu0 0.0
    %97 = vmatpush1.msra.mxu0 0.0
    %98 = vmatprep.subr.mxu0 0.0
    %99 = vmatpush1.msra.mxu0 0.0
    %100 = vmatprep.subr.mxu0 0.0
    %101 = vmatpush1.msra.mxu0 0.0
    %102 = vmatprep.subr.mxu0 0.0
    %103 = vmatpush1.msra.mxu0 0.0
    %104 = vmatprep.subr.mxu0 0.0
    %105 = vmatpush1.msra.mxu0 0.0
    %106 = vmatprep.subr.mxu0 0.0
    %107 = vmatpush1.msra.mxu0 0.0
    %108 = vmatprep.subr.mxu0 0.0
    %109 = vmatpush1.msra.mxu0 0.0
    %110 = vmatprep.subr.mxu0 0.0
    %111 = vmatpush1.msra.mxu0 0.0
    %112 = vmatprep.subr.mxu0 0.0
    %113 = vmatpush1.msra.mxu0 0.0
    %114 = vmatprep.mubr.f32.mxu0 0.0
    %115 = vmatmul.mubr.f32.gmra.mrb[0].mxu0 %v48
    %v116 = vpop.f32.mrb[0].mxu0
    %v117 = vadd.f32 %v45, %v116
    %v118 = vpop.f32.mrb[0].mxu0
    %119 = vdwg.mxu0
    %v120 = vld [vmem:[%s5] sm:$0xf]
    %v122 = vsel %vm46, %v120, 0
    %124 = vmatprep.subr.mxu0 0.0
    %125 = vmatpush1.msra.mxu0 %v24
    %126 = vmatprep.subr.mxu0 0.0
    %127 = vmatpush1.msra.mxu0 %v25
    %128 = vmatprep.subr.mxu0 0.0
    %129 = vmatpush1.msra.mxu0 %v26
    %130 = vmatprep.subr.mxu0 0.0
    %131 = vmatpush1.msra.mxu0 %v27
    %132 = vmatprep.subr.mxu0 0.0
    %133 = vmatpush1.msra.mxu0 0.0
    %134 = vmatprep.subr.mxu0 0.0
    %135 = vmatpush1.msra.mxu0 0.0
    %136 = vmatprep.subr.mxu0 0.0
    %137 = vmatpush1.msra.mxu0 0.0
    %138 = vmatprep.subr.mxu0 0.0
    %139 = vmatpush1.msra.mxu0 0.0
    %140 = vmatprep.subr.mxu0 0.0
    %141 = vmatpush1.msra.mxu0 0.0
    %142 = vmatprep.subr.mxu0 0.0
    %143 = vmatpush1.msra.mxu0 0.0
    %144 = vmatprep.subr.mxu0 0.0
    %145 = vmatpush1.msra.mxu0 0.0
    %146 = vmatprep.subr.mxu0 0.0
    %147 = vmatpush1.msra.mxu0 0.0
    %148 = vmatprep.subr.mxu0 0.0
    %149 = vmatpush1.msra.mxu0 0.0
    %150 = vmatprep.subr.mxu0 0.0
    %151 = vmatpush1.msra.mxu0 0.0
    %152 = vmatprep.subr.mxu0 0.0
    %153 = vmatpush1.msra.mxu0 0.0
    %154 = vmatprep.subr.mxu0 0.0
    %155 = vmatpush1.msra.mxu0 0.0
    %156 = vmatprep.subr.mxu0 0.0
    %157 = vmatpush1.msra.mxu0 0.0
    %158 = vmatprep.subr.mxu0 0.0
    %159 = vmatpush1.msra.mxu0 0.0
    %160 = vmatprep.subr.mxu0 0.0
    %161 = vmatpush1.msra.mxu0 0.0
    %162 = vmatprep.subr.mxu0 0.0
    %163 = vmatpush1.msra.mxu0 0.0
    %164 = vmatprep.subr.mxu0 0.0
    %165 = vmatpush1.msra.mxu0 0.0
    %166 = vmatprep.subr.mxu0 0.0
    %167 = vmatpush1.msra.mxu0 0.0
    %168 = vmatprep.subr.mxu0 0.0
    %169 = vmatpush1.msra.mxu0 0.0
    %170 = vmatprep.subr.mxu0 0.0
    %171 = vmatpush1.msra.mxu0 0.0
    %172 = vmatprep.subr.mxu0 0.0
    %173 = vmatpush1.msra.mxu0 0.0
    %174 = vmatprep.subr.mxu0 0.0
    %175 = vmatpush1.msra.mxu0 0.0
    %176 = vmatprep.subr.mxu0 0.0
    %177 = vmatpush1.msra.mxu0 0.0
    %178 = vmatprep.subr.mxu0 0.0
    %179 = vmatpush1.msra.mxu0 0.0
    %180 = vmatprep.subr.mxu0 0.0
    %181 = vmatpush1.msra.mxu0 0.0
    %182 = vmatprep.subr.mxu0 0.0
    %183 = vmatpush1.msra.mxu0 0.0
    %184 = vmatprep.subr.mxu0 0.0
    %185 = vmatpush1.msra.mxu0 0.0
    %186 = vmatprep.subr.mxu0 0.0
    %187 = vmatpush1.msra.mxu0 0.0
    %188 = vmatprep.mubr.f32.mxu0 0.0
    %189 = vmatmul.mubr.f32.gmra.mrb[0].mxu0 %v122
    %v190 = vpop.f32.mrb[0].mxu0
    %v191 = vadd.f32 0.0, %v190
    %v192 = vpop.f32.mrb[0].mxu0
    %193 = vdwg.mxu0
    %v194 = vrot.slane %v120, 2
    %v195 = vsel %vm46, %v194, 0
    %197 = vmatprep.subr.mxu0 0.0
    %198 = vmatpush1.msra.mxu0 %v32
    %199 = vmatprep.subr.mxu0 0.0
    %200 = vmatpush1.msra.mxu0 %v33
    %201 = vmatprep.subr.mxu0 0.0
    %202 = vmatpush1.msra.mxu0 %v34
    %203 = vmatprep.subr.mxu0 0.0
    %204 = vmatpush1.msra.mxu0 %v35
    %205 = vmatprep.subr.mxu0 0.0
    %206 = vmatpush1.msra.mxu0 0.0
    %207 = vmatprep.subr.mxu0 0.0
    %208 = vmatpush1.msra.mxu0 0.0
    %209 = vmatprep.subr.mxu0 0.0
    %210 = vmatpush1.msra.mxu0 0.0
    %211 = vmatprep.subr.mxu0 0.0
    %212 = vmatpush1.msra.mxu0 0.0
    %213 = vmatprep.subr.mxu0 0.0
    %214 = vmatpush1.msra.mxu0 0.0
    %215 = vmatprep.subr.mxu0 0.0
    %216 = vmatpush1.msra.mxu0 0.0
    %217 = vmatprep.subr.mxu0 0.0
    %218 = vmatpush1.msra.mxu0 0.0
    %219 = vmatprep.subr.mxu0 0.0
    %220 = vmatpush1.msra.mxu0 0.0
    %221 = vmatprep.subr.mxu0 0.0
    %222 = vmatpush1.msra.mxu0 0.0
    %223 = vmatprep.subr.mxu0 0.0
    %224 = vmatpush1.msra.mxu0 0.0
    %225 = vmatprep.subr.mxu0 0.0
    %226 = vmatpush1.msra.mxu0 0.0
    %227 = vmatprep.subr.mxu0 0.0
    %228 = vmatpush1.msra.mxu0 0.0
    %229 = vmatprep.subr.mxu0 0.0
    %230 = vmatpush1.msra.mxu0 0.0
    %231 = vmatprep.subr.mxu0 0.0
    %232 = vmatpush1.msra.mxu0 0.0
    %233 = vmatprep.subr.mxu0 0.0
    %234 = vmatpush1.msra.mxu0 0.0
    %235 = vmatprep.subr.mxu0 0.0
    %236 = vmatpush1.msra.mxu0 0.0
    %237 = vmatprep.subr.mxu0 0.0
    %238 = vmatpush1.msra.mxu0 0.0
    %239 = vmatprep.subr.mxu0 0.0
    %240 = vmatpush1.msra.mxu0 0.0
    %241 = vmatprep.subr.mxu0 0.0
    %242 = vmatpush1.msra.mxu0 0.0
    %243 = vmatprep.subr.mxu0 0.0
    %244 = vmatpush1.msra.mxu0 0.0
    %245 = vmatprep.subr.mxu0 0.0
    %246 = vmatpush1.msra.mxu0 0.0
    %247 = vmatprep.subr.mxu0 0.0
    %248 = vmatpush1.msra.mxu0 0.0
    %249 = vmatprep.subr.mxu0 0.0
    %250 = vmatpush1.msra.mxu0 0.0
    %251 = vmatprep.subr.mxu0 0.0
    %252 = vmatpush1.msra.mxu0 0.0
    %253 = vmatprep.subr.mxu0 0.0
    %254 = vmatpush1.msra.mxu0 0.0
    %255 = vmatprep.subr.mxu0 0.0
    %256 = vmatpush1.msra.mxu0 0.0
    %257 = vmatprep.subr.mxu0 0.0
    %258 = vmatpush1.msra.mxu0 0.0
    %259 = vmatprep.subr.mxu0 0.0
    %260 = vmatpush1.msra.mxu0 0.0
    %261 = vmatprep.mubr.f32.mxu0 0.0
    %262 = vmatmul.mubr.f32.gmra.mrb[0].mxu0 %v195
    %v263 = vpop.f32.mrb[0].mxu0
    %v264 = vadd.f32 0.0, %v263
    %v265 = vpop.f32.mrb[0].mxu0
    %266 = vdwg.mxu0
    %v267 = vadd.f32 %v117, %v191
    %v268 = vxor.u32 %v267, 2147483648
    %v269 = vmul.f32 %v268, 1.442695
    %v270 = vpow.pop %v269
    %v271 = vadd.f32 %v270, 1.0
    %v272 = vrcp.pop %v271
    %v273 = vmul.f32 1.0, %v272
    %v274 = vtanh.pop %v267
    %v275 = vrot.slane %v120, 1
    %276 = vrot.lane.b32.xlu0 %v275, 32
    %v277 = vpop.permute.xlu0 %276
    %v279 = vmul.f32 %v273, %v277
    %281 = vrot.lane.b32.xlu0 %v274, 64
    %v282 = vpop.permute.xlu0 %281
    %v284 = vmul.f32 %v273, %v282
    %286 = vrot.lane.b32.xlu0 %v284, 32
    %v287 = vpop.permute.xlu0 %286
    %v289 = vadd.f32 %v279, %v287
    %v290 = vtanh.pop %v289
    %292 = vrot.lane.b32.xlu0 %v290, 64
    %v293 = vpop.permute.xlu0 %292
    %v295 = vmul.f32 %v273, %v293
    %297 = vrot.lane.b32.xlu0 %v295, 32
    %v298 = vpop.permute.xlu0 %297
    %v299 = vsel %vm46, %v298, 0
    %301 = vmatprep.subr.mxu0 0.0
    %302 = vmatpush1.msra.mxu0 %v28
    %303 = vmatprep.subr.mxu0 0.0
    %304 = vmatpush1.msra.mxu0 %v29
    %305 = vmatprep.subr.mxu0 0.0
    %306 = vmatpush1.msra.mxu0 %v30
    %307 = vmatprep.subr.mxu0 0.0
    %308 = vmatpush1.msra.mxu0 %v31
    %309 = vmatprep.subr.mxu0 0.0
    %310 = vmatpush1.msra.mxu0 0.0
    %311 = vmatprep.subr.mxu0 0.0
    %312 = vmatpush1.msra.mxu0 0.0
    %313 = vmatprep.subr.mxu0 0.0
    %314 = vmatpush1.msra.mxu0 0.0
    %315 = vmatprep.subr.mxu0 0.0
    %316 = vmatpush1.msra.mxu0 0.0
    %317 = vmatprep.subr.mxu0 0.0
    %318 = vmatpush1.msra.mxu0 0.0
    %319 = vmatprep.subr.mxu0 0.0
    %320 = vmatpush1.msra.mxu0 0.0
    %321 = vmatprep.subr.mxu0 0.0
    %322 = vmatpush1.msra.mxu0 0.0
    %323 = vmatprep.subr.mxu0 0.0
    %324 = vmatpush1.msra.mxu0 0.0
    %325 = vmatprep.subr.mxu0 0.0
    %326 = vmatpush1.msra.mxu0 0.0
    %327 = vmatprep.subr.mxu0 0.0
    %328 = vmatpush1.msra.mxu0 0.0
    %329 = vmatprep.subr.mxu0 0.0
    %330 = vmatpush1.msra.mxu0 0.0
    %331 = vmatprep.subr.mxu0 0.0
    %332 = vmatpush1.msra.mxu0 0.0
    %333 = vmatprep.subr.mxu0 0.0
    %334 = vmatpush1.msra.mxu0 0.0
    %335 = vmatprep.subr.mxu0 0.0
    %336 = vmatpush1.msra.mxu0 0.0
    %337 = vmatprep.subr.mxu0 0.0
    %338 = vmatpush1.msra.mxu0 0.0
    %339 = vmatprep.subr.mxu0 0.0
    %340 = vmatpush1.msra.mxu0 0.0
    %341 = vmatprep.subr.mxu0 0.0
    %342 = vmatpush1.msra.mxu0 0.0
    %343 = vmatprep.subr.mxu0 0.0
    %344 = vmatpush1.msra.mxu0 0.0
    %345 = vmatprep.subr.mxu0 0.0
    %346 = vmatpush1.msra.mxu0 0.0
    %347 = vmatprep.subr.mxu0 0.0
    %348 = vmatpush1.msra.mxu0 0.0
    %349 = vmatprep.subr.mxu0 0.0
    %350 = vmatpush1.msra.mxu0 0.0
    %351 = vmatprep.subr.mxu0 0.0
    %352 = vmatpush1.msra.mxu0 0.0
    %353 = vmatprep.subr.mxu0 0.0
    %354 = vmatpush1.msra.mxu0 0.0
    %355 = vmatprep.subr.mxu0 0.0
    %356 = vmatpush1.msra.mxu0 0.0
    %357 = vmatprep.subr.mxu0 0.0
    %358 = vmatpush1.msra.mxu0 0.0
    %359 = vmatprep.subr.mxu0 0.0
    %360 = vmatpush1.msra.mxu0 0.0
    %361 = vmatprep.subr.mxu0 0.0
    %362 = vmatpush1.msra.mxu0 0.0
    %363 = vmatprep.subr.mxu0 0.0
    %364 = vmatpush1.msra.mxu0 0.0
    %365 = vmatprep.mubr.f32.mxu0 0.0
    %366 = vmatmul.mubr.f32.gmra.mrb[0].mxu0 %v299
    %v367 = vpop.f32.mrb[0].mxu0
    %v368 = vadd.f32 %v264, %v367
    %v369 = vpop.f32.mrb[0].mxu0
    %370 = vdwg.mxu0
    %v372 = vrot.slane %v36, 1
    %v374 = vadd.f32 %v368, %v372
    %v375 = vxor.u32 %v374, 2147483648
    %v376 = vmul.f32 %v375, 1.442695
    %v377 = vpow.pop %v376
    %v378 = vadd.f32 %v377, 1.0
    %v379 = vrcp.pop %v378
    %v380 = vmul.f32 1.0, %v379
    %v381 = vtanh.pop %v374
    %v382 = vrot.slane %v120, 3
    %383 = vrot.lane.b32.xlu0 %v382, 32
    %v384 = vpop.permute.xlu0 %383
    %v386 = vmul.f32 %v380, %v384
    %388 = vrot.lane.b32.xlu0 %v381, 64
    %v389 = vpop.permute.xlu0 %388
    %v391 = vmul.f32 %v380, %v389
    %393 = vrot.lane.b32.xlu0 %v391, 32
    %v394 = vpop.permute.xlu0 %393
    %v396 = vadd.f32 %v386, %v394
    %v397 = vtanh.pop %v396
    %399 = vrot.lane.b32.xlu0 %v397, 64
    %v400 = vpop.permute.xlu0 %399
    %v402 = vmul.f32 %v380, %v400
    %403 = vmatprep.subr.mxu0 0.0
    %404 = vmatpush1.msra.mxu0 %v24
    %405 = vmatprep.subr.mxu0 0.0
    %406 = vmatpush1.msra.mxu0 %v25
    %407 = vmatprep.subr.mxu0 0.0
    %408 = vmatpush1.msra.mxu0 %v26
    %409 = vmatprep.subr.mxu0 0.0
    %410 = vmatpush1.msra.mxu0 %v27
    %411 = vmatprep.subr.mxu0 0.0
    %412 = vmatpush1.msra.mxu0 0.0
    %413 = vmatprep.subr.mxu0 0.0
    %414 = vmatpush1.msra.mxu0 0.0
    %415 = vmatprep.subr.mxu0 0.0
    %416 = vmatpush1.msra.mxu0 0.0
    %417 = vmatprep.subr.mxu0 0.0
    %418 = vmatpush1.msra.mxu0 0.0
    %419 = vmatprep.subr.mxu0 0.0
    %420 = vmatpush1.msra.mxu0 0.0
    %421 = vmatprep.subr.mxu0 0.0
    %422 = vmatpush1.msra.mxu0 0.0
    %423 = vmatprep.subr.mxu0 0.0
    %424 = vmatpush1.msra.mxu0 0.0
    %425 = vmatprep.subr.mxu0 0.0
    %426 = vmatpush1.msra.mxu0 0.0
    %427 = vmatprep.subr.mxu0 0.0
    %428 = vmatpush1.msra.mxu0 0.0
    %429 = vmatprep.subr.mxu0 0.0
    %430 = vmatpush1.msra.mxu0 0.0
    %431 = vmatprep.subr.mxu0 0.0
    %432 = vmatpush1.msra.mxu0 0.0
    %433 = vmatprep.subr.mxu0 0.0
    %434 = vmatpush1.msra.mxu0 0.0
    %435 = vmatprep.subr.mxu0 0.0
    %436 = vmatpush1.msra.mxu0 0.0
    %437 = vmatprep.subr.mxu0 0.0
    %438 = vmatpush1.msra.mxu0 0.0
    %439 = vmatprep.subr.mxu0 0.0
    %440 = vmatpush1.msra.mxu0 0.0
    %441 = vmatprep.subr.mxu0 0.0
    %442 = vmatpush1.msra.mxu0 0.0
    %443 = vmatprep.subr.mxu0 0.0
    %444 = vmatpush1.msra.mxu0 0.0
    %445 = vmatprep.subr.mxu0 0.0
    %446 = vmatpush1.msra.mxu0 0.0
    %447 = vmatprep.subr.mxu0 0.0
    %448 = vmatpush1.msra.mxu0 0.0
    %449 = vmatprep.subr.mxu0 0.0
    %450 = vmatpush1.msra.mxu0 0.0
    %451 = vmatprep.subr.mxu0 0.0
    %452 = vmatpush1.msra.mxu0 0.0
    %453 = vmatprep.subr.mxu0 0.0
    %454 = vmatpush1.msra.mxu0 0.0
    %455 = vmatprep.subr.mxu0 0.0
    %456 = vmatpush1.msra.mxu0 0.0
    %457 = vmatprep.subr.mxu0 0.0
    %458 = vmatpush1.msra.mxu0 0.0
    %459 = vmatprep.subr.mxu0 0.0
    %460 = vmatpush1.msra.mxu0 0.0
    %461 = vmatprep.subr.mxu0 0.0
    %462 = vmatpush1.msra.mxu0 0.0
    %463 = vmatprep.subr.mxu0 0.0
    %464 = vmatpush1.msra.mxu0 0.0
    %465 = vmatprep.subr.mxu0 0.0
    %466 = vmatpush1.msra.mxu0 0.0
    %467 = vmatprep.mubr.f32.mxu0 0.0
    %468 = vmatmul.mubr.f32.gmra.mrb[0].mxu0 %v299
    %v469 = vpop.f32.mrb[0].mxu0
    %v470 = vadd.f32 0.0, %v469
    %v471 = vpop.f32.mrb[0].mxu0
    %472 = vdwg.mxu0
    %474 = vrot.lane.b32.xlu0 %v402, 32
    %v475 = vpop.permute.xlu0 %474
    %v476 = vsel %vm46, %v475, 0
    %478 = vmatprep.subr.mxu0 0.0
    %479 = vmatpush1.msra.mxu0 %v32
    %480 = vmatprep.subr.mxu0 0.0
    %481 = vmatpush1.msra.mxu0 %v33
    %482 = vmatprep.subr.mxu0 0.0
    %483 = vmatpush1.msra.mxu0 %v34
    %484 = vmatprep.subr.mxu0 0.0
    %485 = vmatpush1.msra.mxu0 %v35
    %486 = vmatprep.subr.mxu0 0.0
    %487 = vmatpush1.msra.mxu0 0.0
    %488 = vmatprep.subr.mxu0 0.0
    %489 = vmatpush1.msra.mxu0 0.0
    %490 = vmatprep.subr.mxu0 0.0
    %491 = vmatpush1.msra.mxu0 0.0
    %492 = vmatprep.subr.mxu0 0.0
    %493 = vmatpush1.msra.mxu0 0.0
    %494 = vmatprep.subr.mxu0 0.0
    %495 = vmatpush1.msra.mxu0 0.0
    %496 = vmatprep.subr.mxu0 0.0
    %497 = vmatpush1.msra.mxu0 0.0
    %498 = vmatprep.subr.mxu0 0.0
    %499 = vmatpush1.msra.mxu0 0.0
    %500 = vmatprep.subr.mxu0 0.0
    %501 = vmatpush1.msra.mxu0 0.0
    %502 = vmatprep.subr.mxu0 0.0
    %503 = vmatpush1.msra.mxu0 0.0
    %504 = vmatprep.subr.mxu0 0.0
    %505 = vmatpush1.msra.mxu0 0.0
    %506 = vmatprep.subr.mxu0 0.0
    %507 = vmatpush1.msra.mxu0 0.0
    %508 = vmatprep.subr.mxu0 0.0
    %509 = vmatpush1.msra.mxu0 0.0
    %510 = vmatprep.subr.mxu0 0.0
    %511 = vmatpush1.msra.mxu0 0.0
    %512 = vmatprep.subr.mxu0 0.0
    %513 = vmatpush1.msra.mxu0 0.0
    %514 = vmatprep.subr.mxu0 0.0
    %515 = vmatpush1.msra.mxu0 0.0
    %516 = vmatprep.subr.mxu0 0.0
    %517 = vmatpush1.msra.mxu0 0.0
    %518 = vmatprep.subr.mxu0 0.0
    %519 = vmatpush1.msra.mxu0 0.0
    %520 = vmatprep.subr.mxu0 0.0
    %521 = vmatpush1.msra.mxu0 0.0
    %522 = vmatprep.subr.mxu0 0.0
    %523 = vmatpush1.msra.mxu0 0.0
    %524 = vmatprep.subr.mxu0 0.0
    %525 = vmatpush1.msra.mxu0 0.0
    %526 = vmatprep.subr.mxu0 0.0
    %527 = vmatpush1.msra.mxu0 0.0
    %528 = vmatprep.subr.mxu0 0.0
    %529 = vmatpush1.msra.mxu0 0.0
    %530 = vmatprep.subr.mxu0 0.0
    %531 = vmatpush1.msra.mxu0 0.0
    %532 = vmatprep.subr.mxu0 0.0
    %533 = vmatpush1.msra.mxu0 0.0
    %534 = vmatprep.subr.mxu0 0.0
    %535 = vmatpush1.msra.mxu0 0.0
    %536 = vmatprep.subr.mxu0 0.0
    %537 = vmatpush1.msra.mxu0 0.0
    %538 = vmatprep.subr.mxu0 0.0
    %539 = vmatpush1.msra.mxu0 0.0
    %540 = vmatprep.subr.mxu0 0.0
    %541 = vmatpush1.msra.mxu0 0.0
    %542 = vmatprep.mubr.f32.mxu0 0.0
    %543 = vmatmul.mubr.f32.gmra.mrb[0].mxu0 %v476
    %v544 = vpop.f32.mrb[0].mxu0
    %v545 = vadd.f32 0.0, %v544
    %v546 = vpop.f32.mrb[0].mxu0
    %547 = vdwg.mxu0
    %v549 = vrot.slane %v470, 7
    %v551 = vadd.f32 %v117, %v549
    %v552 = vxor.u32 %v551, 2147483648
    %v553 = vmul.f32 %v552, 1.442695
    %v554 = vpow.pop %v553
    %v555 = vadd.f32 %v554, 1.0
    %v556 = vrcp.pop %v555
    %v557 = vmul.f32 1.0, %v556
    %v558 = vtanh.pop %v551
    %v560 = vrot.slane %v289, 7
    %v562 = vmul.f32 %v557, %v560
    %564 = vrot.lane.b32.xlu0 %v558, 64
    %v565 = vpop.permute.xlu0 %564
    %v567 = vmul.f32 %v557, %v565
    %569 = vrot.lane.b32.xlu0 %v567, 32
    %v570 = vpop.permute.xlu0 %569
    %v572 = vadd.f32 %v562, %v570
    %v573 = vtanh.pop %v572
    %575 = vrot.lane.b32.xlu0 %v573, 64
    %v576 = vpop.permute.xlu0 %575
    %v578 = vmul.f32 %v557, %v576
    %v580 = vrot.slane %v578, 1
    %581 = vrot.lane.b32.xlu0 %v580, 32
    %v582 = vpop.permute.xlu0 %581
    %v583 = vsel %vm46, %v582, 0
    %585 = vmatprep.subr.mxu0 0.0
    %586 = vmatpush1.msra.mxu0 %v28
    %587 = vmatprep.subr.mxu0 0.0
    %588 = vmatpush1.msra.mxu0 %v29
    %589 = vmatprep.subr.mxu0 0.0
    %590 = vmatpush1.msra.mxu0 %v30
    %591 = vmatprep.subr.mxu0 0.0
    %592 = vmatpush1.msra.mxu0 %v31
    %593 = vmatprep.subr.mxu0 0.0
    %594 = vmatpush1.msra.mxu0 0.0
    %595 = vmatprep.subr.mxu0 0.0
    %596 = vmatpush1.msra.mxu0 0.0
    %597 = vmatprep.subr.mxu0 0.0
    %598 = vmatpush1.msra.mxu0 0.0
    %599 = vmatprep.subr.mxu0 0.0
    %600 = vmatpush1.msra.mxu0 0.0
    %601 = vmatprep.subr.mxu0 0.0
    %602 = vmatpush1.msra.mxu0 0.0
    %603 = vmatprep.subr.mxu0 0.0
    %604 = vmatpush1.msra.mxu0 0.0
    %605 = vmatprep.subr.mxu0 0.0
    %606 = vmatpush1.msra.mxu0 0.0
    %607 = vmatprep.subr.mxu0 0.0
    %608 = vmatpush1.msra.mxu0 0.0
    %609 = vmatprep.subr.mxu0 0.0
    %610 = vmatpush1.msra.mxu0 0.0
    %611 = vmatprep.subr.mxu0 0.0
    %612 = vmatpush1.msra.mxu0 0.0
    %613 = vmatprep.subr.mxu0 0.0
    %614 = vmatpush1.msra.mxu0 0.0
    %615 = vmatprep.subr.mxu0 0.0
    %616 = vmatpush1.msra.mxu0 0.0
    %617 = vmatprep.subr.mxu0 0.0
    %618 = vmatpush1.msra.mxu0 0.0
    %619 = vmatprep.subr.mxu0 0.0
    %620 = vmatpush1.msra.mxu0 0.0
    %621 = vmatprep.subr.mxu0 0.0
    %622 = vmatpush1.msra.mxu0 0.0
    %623 = vmatprep.subr.mxu0 0.0
    %624 = vmatpush1.msra.mxu0 0.0
    %625 = vmatprep.subr.mxu0 0.0
    %626 = vmatpush1.msra.mxu0 0.0
    %627 = vmatprep.subr.mxu0 0.0
    %628 = vmatpush1.msra.mxu0 0.0
    %629 = vmatprep.subr.mxu0 0.0
    %630 = vmatpush1.msra.mxu0 0.0
    %631 = vmatprep.subr.mxu0 0.0
    %632 = vmatpush1.msra.mxu0 0.0
    %633 = vmatprep.subr.mxu0 0.0
    %634 = vmatpush1.msra.mxu0 0.0
    %635 = vmatprep.subr.mxu0 0.0
    %636 = vmatpush1.msra.mxu0 0.0
    %637 = vmatprep.subr.mxu0 0.0
    %638 = vmatpush1.msra.mxu0 0.0
    %639 = vmatprep.subr.mxu0 0.0
    %640 = vmatpush1.msra.mxu0 0.0
    %641 = vmatprep.subr.mxu0 0.0
    %642 = vmatpush1.msra.mxu0 0.0
    %643 = vmatprep.subr.mxu0 0.0
    %644 = vmatpush1.msra.mxu0 0.0
    %645 = vmatprep.subr.mxu0 0.0
    %646 = vmatpush1.msra.mxu0 0.0
    %647 = vmatprep.subr.mxu0 0.0
    %648 = vmatpush1.msra.mxu0 0.0
    %649 = vmatprep.mubr.f32.mxu0 0.0
    %650 = vmatmul.mubr.f32.gmra.mrb[0].mxu0 %v583
    %v651 = vpop.f32.mrb[0].mxu0
    %v652 = vadd.f32 %v545, %v651
    %v653 = vpop.f32.mrb[0].mxu0
    %654 = vdwg.mxu0
    %v655 = vadd.f32 %v652, %v372
    %v656 = vxor.u32 %v655, 2147483648
    %v657 = vmul.f32 %v656, 1.442695
    %v658 = vpow.pop %v657
    %v659 = vadd.f32 %v658, 1.0
    %v660 = vrcp.pop %v659
    %v661 = vmul.f32 1.0, %v660
    %v662 = vtanh.pop %v655
    %v663 = vmul.f32 %v661, %v396
    %665 = vrot.lane.b32.xlu0 %v662, 64
    %v666 = vpop.permute.xlu0 %665
    %v668 = vmul.f32 %v661, %v666
    %670 = vrot.lane.b32.xlu0 %v668, 32
    %v671 = vpop.permute.xlu0 %670
    %v673 = vadd.f32 %v663, %v671
    %v674 = vtanh.pop %v673
    %676 = vrot.lane.b32.xlu0 %v674, 64
    %v677 = vpop.permute.xlu0 %676
    %v679 = vmul.f32 %v661, %v677
    %680 = vmatprep.subr.mxu0 0.0
    %681 = vmatpush1.msra.mxu0 %v24
    %682 = vmatprep.subr.mxu0 0.0
    %683 = vmatpush1.msra.mxu0 %v25
    %684 = vmatprep.subr.mxu0 0.0
    %685 = vmatpush1.msra.mxu0 %v26
    %686 = vmatprep.subr.mxu0 0.0
    %687 = vmatpush1.msra.mxu0 %v27
    %688 = vmatprep.subr.mxu0 0.0
    %689 = vmatpush1.msra.mxu0 0.0
    %690 = vmatprep.subr.mxu0 0.0
    %691 = vmatpush1.msra.mxu0 0.0
    %692 = vmatprep.subr.mxu0 0.0
    %693 = vmatpush1.msra.mxu0 0.0
    %694 = vmatprep.subr.mxu0 0.0
    %695 = vmatpush1.msra.mxu0 0.0
    %696 = vmatprep.subr.mxu0 0.0
    %697 = vmatpush1.msra.mxu0 0.0
    %698 = vmatprep.subr.mxu0 0.0
    %699 = vmatpush1.msra.mxu0 0.0
    %700 = vmatprep.subr.mxu0 0.0
    %701 = vmatpush1.msra.mxu0 0.0
    %702 = vmatprep.subr.mxu0 0.0
    %703 = vmatpush1.msra.mxu0 0.0
    %704 = vmatprep.subr.mxu0 0.0
    %705 = vmatpush1.msra.mxu0 0.0
    %706 = vmatprep.subr.mxu0 0.0
    %707 = vmatpush1.msra.mxu0 0.0
    %708 = vmatprep.subr.mxu0 0.0
    %709 = vmatpush1.msra.mxu0 0.0
    %710 = vmatprep.subr.mxu0 0.0
    %711 = vmatpush1.msra.mxu0 0.0
    %712 = vmatprep.subr.mxu0 0.0
    %713 = vmatpush1.msra.mxu0 0.0
    %714 = vmatprep.subr.mxu0 0.0
    %715 = vmatpush1.msra.mxu0 0.0
    %716 = vmatprep.subr.mxu0 0.0
    %717 = vmatpush1.msra.mxu0 0.0
    %718 = vmatprep.subr.mxu0 0.0
    %719 = vmatpush1.msra.mxu0 0.0
    %720 = vmatprep.subr.mxu0 0.0
    %721 = vmatpush1.msra.mxu0 0.0
    %722 = vmatprep.subr.mxu0 0.0
    %723 = vmatpush1.msra.mxu0 0.0
    %724 = vmatprep.subr.mxu0 0.0
    %725 = vmatpush1.msra.mxu0 0.0
    %726 = vmatprep.subr.mxu0 0.0
    %727 = vmatpush1.msra.mxu0 0.0
    %728 = vmatprep.subr.mxu0 0.0
    %729 = vmatpush1.msra.mxu0 0.0
    %730 = vmatprep.subr.mxu0 0.0
    %731 = vmatpush1.msra.mxu0 0.0
    %732 = vmatprep.subr.mxu0 0.0
    %733 = vmatpush1.msra.mxu0 0.0
    %734 = vmatprep.subr.mxu0 0.0
    %735 = vmatpush1.msra.mxu0 0.0
    %736 = vmatprep.subr.mxu0 0.0
    %737 = vmatpush1.msra.mxu0 0.0
    %738 = vmatprep.subr.mxu0 0.0
    %739 = vmatpush1.msra.mxu0 0.0
    %740 = vmatprep.subr.mxu0 0.0
    %741 = vmatpush1.msra.mxu0 0.0
    %742 = vmatprep.subr.mxu0 0.0
    %743 = vmatpush1.msra.mxu0 0.0
    %744 = vmatprep.mubr.f32.mxu0 0.0
    %745 = vmatmul.mubr.f32.gmra.mrb[0].mxu0 %v583
    %v746 = vpop.f32.mrb[0].mxu0
    %v747 = vadd.f32 0.0, %v746
    %v748 = vpop.f32.mrb[0].mxu0
    %749 = vdwg.mxu0
    %751 = vrot.lane.b32.xlu0 %v679, 32
    %v752 = vpop.permute.xlu0 %751
    %v753 = vsel %vm46, %v752, 0
    %755 = vmatprep.subr.mxu0 0.0
    %756 = vmatpush1.msra.mxu0 %v32
    %757 = vmatprep.subr.mxu0 0.0
    %758 = vmatpush1.msra.mxu0 %v33
    %759 = vmatprep.subr.mxu0 0.0
    %760 = vmatpush1.msra.mxu0 %v34
    %761 = vmatprep.subr.mxu0 0.0
    %762 = vmatpush1.msra.mxu0 %v35
    %763 = vmatprep.subr.mxu0 0.0
    %764 = vmatpush1.msra.mxu0 0.0
    %765 = vmatprep.subr.mxu0 0.0
    %766 = vmatpush1.msra.mxu0 0.0
    %767 = vmatprep.subr.mxu0 0.0
    %768 = vmatpush1.msra.mxu0 0.0
    %769 = vmatprep.subr.mxu0 0.0
    %770 = vmatpush1.msra.mxu0 0.0
    %771 = vmatprep.subr.mxu0 0.0
    %772 = vmatpush1.msra.mxu0 0.0
    %773 = vmatprep.subr.mxu0 0.0
    %774 = vmatpush1.msra.mxu0 0.0
    %775 = vmatprep.subr.mxu0 0.0
    %776 = vmatpush1.msra.mxu0 0.0
    %777 = vmatprep.subr.mxu0 0.0
    %778 = vmatpush1.msra.mxu0 0.0
    %779 = vmatprep.subr.mxu0 0.0
    %780 = vmatpush1.msra.mxu0 0.0
    %781 = vmatprep.subr.mxu0 0.0
    %782 = vmatpush1.msra.mxu0 0.0
    %783 = vmatprep.subr.mxu0 0.0
    %784 = vmatpush1.msra.mxu0 0.0
    %785 = vmatprep.subr.mxu0 0.0
    %786 = vmatpush1.msra.mxu0 0.0
    %787 = vmatprep.subr.mxu0 0.0
    %788 = vmatpush1.msra.mxu0 0.0
    %789 = vmatprep.subr.mxu0 0.0
    %790 = vmatpush1.msra.mxu0 0.0
    %791 = vmatprep.subr.mxu0 0.0
    %792 = vmatpush1.msra.mxu0 0.0
    %793 = vmatprep.subr.mxu0 0.0
    %794 = vmatpush1.msra.mxu0 0.0
    %795 = vmatprep.subr.mxu0 0.0
    %796 = vmatpush1.msra.mxu0 0.0
    %797 = vmatprep.subr.mxu0 0.0
    %798 = vmatpush1.msra.mxu0 0.0
    %799 = vmatprep.subr.mxu0 0.0
    %800 = vmatpush1.msra.mxu0 0.0
    %801 = vmatprep.subr.mxu0 0.0
    %802 = vmatpush1.msra.mxu0 0.0
    %803 = vmatprep.subr.mxu0 0.0
    %804 = vmatpush1.msra.mxu0 0.0
    %805 = vmatprep.subr.mxu0 0.0
    %806 = vmatpush1.msra.mxu0 0.0
    %807 = vmatprep.subr.mxu0 0.0
    %808 = vmatpush1.msra.mxu0 0.0
    %809 = vmatprep.subr.mxu0 0.0
    %810 = vmatpush1.msra.mxu0 0.0
    %811 = vmatprep.subr.mxu0 0.0
    %812 = vmatpush1.msra.mxu0 0.0
    %813 = vmatprep.subr.mxu0 0.0
    %814 = vmatpush1.msra.mxu0 0.0
    %815 = vmatprep.subr.mxu0 0.0
    %816 = vmatpush1.msra.mxu0 0.0
    %817 = vmatprep.subr.mxu0 0.0
    %818 = vmatpush1.msra.mxu0 0.0
    %819 = vmatprep.mubr.f32.mxu0 0.0
    %820 = vmatmul.mubr.f32.gmra.mrb[0].mxu0 %v753
    %v821 = vpop.f32.mrb[0].mxu0
    %v822 = vadd.f32 0.0, %v821
    %v823 = vpop.f32.mrb[0].mxu0
    %824 = vdwg.mxu0
    %v826 = vrot.slane %v747, 6
    %v828 = vadd.f32 %v117, %v826
    %v829 = vxor.u32 %v828, 2147483648
    %v830 = vmul.f32 %v829, 1.442695
    %v831 = vpow.pop %v830
    %v832 = vadd.f32 %v831, 1.0
    %v833 = vrcp.pop %v832
    %v834 = vmul.f32 1.0, %v833
    %v835 = vtanh.pop %v828
    %v837 = vrot.slane %v572, 7
    %v839 = vmul.f32 %v834, %v837
    %841 = vrot.lane.b32.xlu0 %v835, 64
    %v842 = vpop.permute.xlu0 %841
    %v844 = vmul.f32 %v834, %v842
    %846 = vrot.lane.b32.xlu0 %v844, 32
    %v847 = vpop.permute.xlu0 %846
    %v849 = vadd.f32 %v839, %v847
    %v850 = vtanh.pop %v849
    %852 = vrot.lane.b32.xlu0 %v850, 64
    %v853 = vpop.permute.xlu0 %852
    %v855 = vmul.f32 %v834, %v853
    %v857 = vrot.slane %v855, 2
    %858 = vrot.lane.b32.xlu0 %v857, 32
    %v859 = vpop.permute.xlu0 %858
    %v860 = vsel %vm46, %v859, 0
    %862 = vmatprep.subr.mxu0 0.0
    %863 = vmatpush1.msra.mxu0 %v28
    %864 = vmatprep.subr.mxu0 0.0
    %865 = vmatpush1.msra.mxu0 %v29
    %866 = vmatprep.subr.mxu0 0.0
    %867 = vmatpush1.msra.mxu0 %v30
    %868 = vmatprep.subr.mxu0 0.0
    %869 = vmatpush1.msra.mxu0 %v31
    %870 = vmatprep.subr.mxu0 0.0
    %871 = vmatpush1.msra.mxu0 0.0
    %872 = vmatprep.subr.mxu0 0.0
    %873 = vmatpush1.msra.mxu0 0.0
    %874 = vmatprep.subr.mxu0 0.0
    %875 = vmatpush1.msra.mxu0 0.0
    %876 = vmatprep.subr.mxu0 0.0
    %877 = vmatpush1.msra.mxu0 0.0
    %878 = vmatprep.subr.mxu0 0.0
    %879 = vmatpush1.msra.mxu0 0.0
    %880 = vmatprep.subr.mxu0 0.0
    %881 = vmatpush1.msra.mxu0 0.0
    %882 = vmatprep.subr.mxu0 0.0
    %883 = vmatpush1.msra.mxu0 0.0
    %884 = vmatprep.subr.mxu0 0.0
    %885 = vmatpush1.msra.mxu0 0.0
    %886 = vmatprep.subr.mxu0 0.0
    %887 = vmatpush1.msra.mxu0 0.0
    %888 = vmatprep.subr.mxu0 0.0
    %889 = vmatpush1.msra.mxu0 0.0
    %890 = vmatprep.subr.mxu0 0.0
    %891 = vmatpush1.msra.mxu0 0.0
    %892 = vmatprep.subr.mxu0 0.0
    %893 = vmatpush1.msra.mxu0 0.0
    %894 = vmatprep.subr.mxu0 0.0
    %895 = vmatpush1.msra.mxu0 0.0
    %896 = vmatprep.subr.mxu0 0.0
    %897 = vmatpush1.msra.mxu0 0.0
    %898 = vmatprep.subr.mxu0 0.0
    %899 = vmatpush1.msra.mxu0 0.0
    %900 = vmatprep.subr.mxu0 0.0
    %901 = vmatpush1.msra.mxu0 0.0
    %902 = vmatprep.subr.mxu0 0.0
    %903 = vmatpush1.msra.mxu0 0.0
    %904 = vmatprep.subr.mxu0 0.0
    %905 = vmatpush1.msra.mxu0 0.0
    %906 = vmatprep.subr.mxu0 0.0
    %907 = vmatpush1.msra.mxu0 0.0
    %908 = vmatprep.subr.mxu0 0.0
    %909 = vmatpush1.msra.mxu0 0.0
    %910 = vmatprep.subr.mxu0 0.0
    %911 = vmatpush1.msra.mxu0 0.0
    %912 = vmatprep.subr.mxu0 0.0
    %913 = vmatpush1.msra.mxu0 0.0
    %914 = vmatprep.subr.mxu0 0.0
    %915 = vmatpush1.msra.mxu0 0.0
    %916 = vmatprep.subr.mxu0 0.0
    %917 = vmatpush1.msra.mxu0 0.0
    %918 = vmatprep.subr.mxu0 0.0
    %919 = vmatpush1.msra.mxu0 0.0
    %920 = vmatprep.subr.mxu0 0.0
    %921 = vmatpush1.msra.mxu0 0.0
    %922 = vmatprep.subr.mxu0 0.0
    %923 = vmatpush1.msra.mxu0 0.0
    %924 = vmatprep.subr.mxu0 0.0
    %925 = vmatpush1.msra.mxu0 0.0
    %926 = vmatprep.mubr.f32.mxu0 0.0
    %927 = vmatmul.mubr.f32.gmra.mrb[0].mxu0 %v860
    %v928 = vpop.f32.mrb[0].mxu0
    %v929 = vadd.f32 %v822, %v928
    %v930 = vpop.f32.mrb[0].mxu0
    %931 = vdwg.mxu0
    %v932 = vadd.f32 %v929, %v372
    %v933 = vxor.u32 %v932, 2147483648
    %v934 = vmul.f32 %v933, 1.442695
    %v935 = vpow.pop %v934
    %v936 = vadd.f32 %v935, 1.0
    %v937 = vrcp.pop %v936
    %v938 = vmul.f32 1.0, %v937
    %v939 = vtanh.pop %v932
    %v940 = vmul.f32 %v938, %v673
    %942 = vrot.lane.b32.xlu0 %v939, 64
    %v943 = vpop.permute.xlu0 %942
    %v945 = vmul.f32 %v938, %v943
    %947 = vrot.lane.b32.xlu0 %v945, 32
    %v948 = vpop.permute.xlu0 %947
    %v950 = vadd.f32 %v940, %v948
    %v951 = vtanh.pop %v950
    %953 = vrot.lane.b32.xlu0 %v951, 64
    %v954 = vpop.permute.xlu0 %953
    %v956 = vmul.f32 %v938, %v954
    %957 = vmatprep.subr.mxu0 0.0
    %958 = vmatpush1.msra.mxu0 %v24
    %959 = vmatprep.subr.mxu0 0.0
    %960 = vmatpush1.msra.mxu0 %v25
    %961 = vmatprep.subr.mxu0 0.0
    %962 = vmatpush1.msra.mxu0 %v26
    %963 = vmatprep.subr.mxu0 0.0
    %964 = vmatpush1.msra.mxu0 %v27
    %965 = vmatprep.subr.mxu0 0.0
    %966 = vmatpush1.msra.mxu0 0.0
    %967 = vmatprep.subr.mxu0 0.0
    %968 = vmatpush1.msra.mxu0 0.0
    %969 = vmatprep.subr.mxu0 0.0
    %970 = vmatpush1.msra.mxu0 0.0
    %971 = vmatprep.subr.mxu0 0.0
    %972 = vmatpush1.msra.mxu0 0.0
    %973 = vmatprep.subr.mxu0 0.0
    %974 = vmatpush1.msra.mxu0 0.0
    %975 = vmatprep.subr.mxu0 0.0
    %976 = vmatpush1.msra.mxu0 0.0
    %977 = vmatprep.subr.mxu0 0.0
    %978 = vmatpush1.msra.mxu0 0.0
    %979 = vmatprep.subr.mxu0 0.0
    %980 = vmatpush1.msra.mxu0 0.0
    %981 = vmatprep.subr.mxu0 0.0
    %982 = vmatpush1.msra.mxu0 0.0
    %983 = vmatprep.subr.mxu0 0.0
    %984 = vmatpush1.msra.mxu0 0.0
    %985 = vmatprep.subr.mxu0 0.0
    %986 = vmatpush1.msra.mxu0 0.0
    %987 = vmatprep.subr.mxu0 0.0
    %988 = vmatpush1.msra.mxu0 0.0
    %989 = vmatprep.subr.mxu0 0.0
    %990 = vmatpush1.msra.mxu0 0.0
    %991 = vmatprep.subr.mxu0 0.0
    %992 = vmatpush1.msra.mxu0 0.0
    %993 = vmatprep.subr.mxu0 0.0
    %994 = vmatpush1.msra.mxu0 0.0
    %995 = vmatprep.subr.mxu0 0.0
    %996 = vmatpush1.msra.mxu0 0.0
    %997 = vmatprep.subr.mxu0 0.0
    %998 = vmatpush1.msra.mxu0 0.0
    %999 = vmatprep.subr.mxu0 0.0
    %1000 = vmatpush1.msra.mxu0 0.0
    %1001 = vmatprep.subr.mxu0 0.0
    %1002 = vmatpush1.msra.mxu0 0.0
    %1003 = vmatprep.subr.mxu0 0.0
    %1004 = vmatpush1.msra.mxu0 0.0
    %1005 = vmatprep.subr.mxu0 0.0
    %1006 = vmatpush1.msra.mxu0 0.0
    %1007 = vmatprep.subr.mxu0 0.0
    %1008 = vmatpush1.msra.mxu0 0.0
    %1009 = vmatprep.subr.mxu0 0.0
    %1010 = vmatpush1.msra.mxu0 0.0
    %1011 = vmatprep.subr.mxu0 0.0
    %1012 = vmatpush1.msra.mxu0 0.0
    %1013 = vmatprep.subr.mxu0 0.0
    %1014 = vmatpush1.msra.mxu0 0.0
    %1015 = vmatprep.subr.mxu0 0.0
    %1016 = vmatpush1.msra.mxu0 0.0
    %1017 = vmatprep.subr.mxu0 0.0
    %1018 = vmatpush1.msra.mxu0 0.0
    %1019 = vmatprep.subr.mxu0 0.0
    %1020 = vmatpush1.msra.mxu0 0.0
    %1021 = vmatprep.mubr.f32.mxu0 0.0
    %1022 = vmatmul.mubr.f32.gmra.mrb[0].mxu0 %v860
    %v1023 = vpop.f32.mrb[0].mxu0
    %v1024 = vadd.f32 0.0, %v1023
    %v1025 = vpop.f32.mrb[0].mxu0
    %1026 = vdwg.mxu0
    %1028 = vrot.lane.b32.xlu0 %v956, 32
    %v1029 = vpop.permute.xlu0 %1028
    %v1030 = vsel %vm46, %v1029, 0
    %1032 = vmatprep.subr.mxu0 0.0
    %1033 = vmatpush1.msra.mxu0 %v32
    %1034 = vmatprep.subr.mxu0 0.0
    %1035 = vmatpush1.msra.mxu0 %v33
    %1036 = vmatprep.subr.mxu0 0.0
    %1037 = vmatpush1.msra.mxu0 %v34
    %1038 = vmatprep.subr.mxu0 0.0
    %1039 = vmatpush1.msra.mxu0 %v35
    %1040 = vmatprep.subr.mxu0 0.0
    %1041 = vmatpush1.msra.mxu0 0.0
    %1042 = vmatprep.subr.mxu0 0.0
    %1043 = vmatpush1.msra.mxu0 0.0
    %1044 = vmatprep.subr.mxu0 0.0
    %1045 = vmatpush1.msra.mxu0 0.0
    %1046 = vmatprep.subr.mxu0 0.0
    %1047 = vmatpush1.msra.mxu0 0.0
    %1048 = vmatprep.subr.mxu0 0.0
    %1049 = vmatpush1.msra.mxu0 0.0
    %1050 = vmatprep.subr.mxu0 0.0
    %1051 = vmatpush1.msra.mxu0 0.0
    %1052 = vmatprep.subr.mxu0 0.0
    %1053 = vmatpush1.msra.mxu0 0.0
    %1054 = vmatprep.subr.mxu0 0.0
    %1055 = vmatpush1.msra.mxu0 0.0
    %1056 = vmatprep.subr.mxu0 0.0
    %1057 = vmatpush1.msra.mxu0 0.0
    %1058 = vmatprep.subr.mxu0 0.0
    %1059 = vmatpush1.msra.mxu0 0.0
    %1060 = vmatprep.subr.mxu0 0.0
    %1061 = vmatpush1.msra.mxu0 0.0
    %1062 = vmatprep.subr.mxu0 0.0
    %1063 = vmatpush1.msra.mxu0 0.0
    %1064 = vmatprep.subr.mxu0 0.0
    %1065 = vmatpush1.msra.mxu0 0.0
    %1066 = vmatprep.subr.mxu0 0.0
    %1067 = vmatpush1.msra.mxu0 0.0
    %1068 = vmatprep.subr.mxu0 0.0
    %1069 = vmatpush1.msra.mxu0 0.0
    %1070 = vmatprep.subr.mxu0 0.0
    %1071 = vmatpush1.msra.mxu0 0.0
    %1072 = vmatprep.subr.mxu0 0.0
    %1073 = vmatpush1.msra.mxu0 0.0
    %1074 = vmatprep.subr.mxu0 0.0
    %1075 = vmatpush1.msra.mxu0 0.0
    %1076 = vmatprep.subr.mxu0 0.0
    %1077 = vmatpush1.msra.mxu0 0.0
    %1078 = vmatprep.subr.mxu0 0.0
    %1079 = vmatpush1.msra.mxu0 0.0
    %1080 = vmatprep.subr.mxu0 0.0
    %1081 = vmatpush1.msra.mxu0 0.0
    %1082 = vmatprep.subr.mxu0 0.0
    %1083 = vmatpush1.msra.mxu0 0.0
    %1084 = vmatprep.subr.mxu0 0.0
    %1085 = vmatpush1.msra.mxu0 0.0
    %1086 = vmatprep.subr.mxu0 0.0
    %1087 = vmatpush1.msra.mxu0 0.0
    %1088 = vmatprep.subr.mxu0 0.0
    %1089 = vmatpush1.msra.mxu0 0.0
    %1090 = vmatprep.subr.mxu0 0.0
    %1091 = vmatpush1.msra.mxu0 0.0
    %1092 = vmatprep.subr.mxu0 0.0
    %1093 = vmatpush1.msra.mxu0 0.0
    %1094 = vmatprep.subr.mxu0 0.0
    %1095 = vmatpush1.msra.mxu0 0.0
    %1096 = vmatprep.mubr.f32.mxu0 0.0
    %1097 = vmatmul.mubr.f32.gmra.mrb[0].mxu0 %v1030
    %v1098 = vpop.f32.mrb[0].mxu0
    %v1099 = vadd.f32 0.0, %v1098
    %v1100 = vpop.f32.mrb[0].mxu0
    %1101 = vdwg.mxu0
    %v1103 = vrot.slane %v1024, 5
    %v1105 = vadd.f32 %v117, %v1103
    %v1106 = vxor.u32 %v1105, 2147483648
    %v1107 = vmul.f32 %v1106, 1.442695
    %v1108 = vpow.pop %v1107
    %v1109 = vadd.f32 %v1108, 1.0
    %v1110 = vrcp.pop %v1109
    %v1111 = vmul.f32 1.0, %v1110
    %v1112 = vtanh.pop %v1105
    %v1114 = vrot.slane %v849, 7
    %v1116 = vmul.f32 %v1111, %v1114
    %1118 = vrot.lane.b32.xlu0 %v1112, 64
    %v1119 = vpop.permute.xlu0 %1118
    %v1121 = vmul.f32 %v1111, %v1119
    %1123 = vrot.lane.b32.xlu0 %v1121, 32
    %v1124 = vpop.permute.xlu0 %1123
    %v1126 = vadd.f32 %v1116, %v1124
    %v1127 = vtanh.pop %v1126
    %1129 = vrot.lane.b32.xlu0 %v1127, 64
    %v1130 = vpop.permute.xlu0 %1129
    %v1132 = vmul.f32 %v1111, %v1130
    %v1134 = vrot.slane %v1132, 3
    %1135 = vrot.lane.b32.xlu0 %v1134, 32
    %v1136 = vpop.permute.xlu0 %1135
    %v1137 = vsel %vm46, %v1136, 0
    %1139 = vmatprep.subr.mxu0 0.0
    %1140 = vmatpush1.msra.mxu0 %v28
    %1141 = vmatprep.subr.mxu0 0.0
    %1142 = vmatpush1.msra.mxu0 %v29
    %1143 = vmatprep.subr.mxu0 0.0
    %1144 = vmatpush1.msra.mxu0 %v30
    %1145 = vmatprep.subr.mxu0 0.0
    %1146 = vmatpush1.msra.mxu0 %v31
    %1147 = vmatprep.subr.mxu0 0.0
    %1148 = vmatpush1.msra.mxu0 0.0
    %1149 = vmatprep.subr.mxu0 0.0
    %1150 = vmatpush1.msra.mxu0 0.0
    %1151 = vmatprep.subr.mxu0 0.0
    %1152 = vmatpush1.msra.mxu0 0.0
    %1153 = vmatprep.subr.mxu0 0.0
    %1154 = vmatpush1.msra.mxu0 0.0
    %1155 = vmatprep.subr.mxu0 0.0
    %1156 = vmatpush1.msra.mxu0 0.0
    %1157 = vmatprep.subr.mxu0 0.0
    %1158 = vmatpush1.msra.mxu0 0.0
    %1159 = vmatprep.subr.mxu0 0.0
    %1160 = vmatpush1.msra.mxu0 0.0
    %1161 = vmatprep.subr.mxu0 0.0
    %1162 = vmatpush1.msra.mxu0 0.0
    %1163 = vmatprep.subr.mxu0 0.0
    %1164 = vmatpush1.msra.mxu0 0.0
    %1165 = vmatprep.subr.mxu0 0.0
    %1166 = vmatpush1.msra.mxu0 0.0
    %1167 = vmatprep.subr.mxu0 0.0
    %1168 = vmatpush1.msra.mxu0 0.0
    %1169 = vmatprep.subr.mxu0 0.0
    %1170 = vmatpush1.msra.mxu0 0.0
    %1171 = vmatprep.subr.mxu0 0.0
    %1172 = vmatpush1.msra.mxu0 0.0
    %1173 = vmatprep.subr.mxu0 0.0
    %1174 = vmatpush1.msra.mxu0 0.0
    %1175 = vmatprep.subr.mxu0 0.0
    %1176 = vmatpush1.msra.mxu0 0.0
    %1177 = vmatprep.subr.mxu0 0.0
    %1178 = vmatpush1.msra.mxu0 0.0
    %1179 = vmatprep.subr.mxu0 0.0
    %1180 = vmatpush1.msra.mxu0 0.0
    %1181 = vmatprep.subr.mxu0 0.0
    %1182 = vmatpush1.msra.mxu0 0.0
    %1183 = vmatprep.subr.mxu0 0.0
    %1184 = vmatpush1.msra.mxu0 0.0
    %1185 = vmatprep.subr.mxu0 0.0
    %1186 = vmatpush1.msra.mxu0 0.0
    %1187 = vmatprep.subr.mxu0 0.0
    %1188 = vmatpush1.msra.mxu0 0.0
    %1189 = vmatprep.subr.mxu0 0.0
    %1190 = vmatpush1.msra.mxu0 0.0
    %1191 = vmatprep.subr.mxu0 0.0
    %1192 = vmatpush1.msra.mxu0 0.0
    %1193 = vmatprep.subr.mxu0 0.0
    %1194 = vmatpush1.msra.mxu0 0.0
    %1195 = vmatprep.subr.mxu0 0.0
    %1196 = vmatpush1.msra.mxu0 0.0
    %1197 = vmatprep.subr.mxu0 0.0
    %1198 = vmatpush1.msra.mxu0 0.0
    %1199 = vmatprep.subr.mxu0 0.0
    %1200 = vmatpush1.msra.mxu0 0.0
    %1201 = vmatprep.subr.mxu0 0.0
    %1202 = vmatpush1.msra.mxu0 0.0
    %1203 = vmatprep.mubr.f32.mxu0 0.0
    %1204 = vmatmul.mubr.f32.gmra.mrb[0].mxu0 %v1137
    %v1205 = vpop.f32.mrb[0].mxu0
    %v1206 = vadd.f32 %v1099, %v1205
    %v1207 = vpop.f32.mrb[0].mxu0
    %1208 = vdwg.mxu0
    %v1209 = vadd.f32 %v1206, %v372
    %v1210 = vxor.u32 %v1209, 2147483648
    %v1211 = vmul.f32 %v1210, 1.442695
    %v1212 = vpow.pop %v1211
    %v1213 = vadd.f32 %v1212, 1.0
    %v1214 = vrcp.pop %v1213
    %v1215 = vmul.f32 1.0, %v1214
    %v1216 = vtanh.pop %v1209
    %v1217 = vmul.f32 %v1215, %v950
    %1219 = vrot.lane.b32.xlu0 %v1216, 64
    %v1220 = vpop.permute.xlu0 %1219
    %v1222 = vmul.f32 %v1215, %v1220
    %1224 = vrot.lane.b32.xlu0 %v1222, 32
    %v1225 = vpop.permute.xlu0 %1224
    %v1227 = vadd.f32 %v1217, %v1225
    %v1228 = vtanh.pop %v1227
    %1230 = vrot.lane.b32.xlu0 %v1228, 64
    %v1231 = vpop.permute.xlu0 %1230
    %v1233 = vmul.f32 %v1215, %v1231
    %1234 = vmatprep.subr.mxu0 0.0
    %1235 = vmatpush1.msra.mxu0 %v24
    %1236 = vmatprep.subr.mxu0 0.0
    %1237 = vmatpush1.msra.mxu0 %v25
    %1238 = vmatprep.subr.mxu0 0.0
    %1239 = vmatpush1.msra.mxu0 %v26
    %1240 = vmatprep.subr.mxu0 0.0
    %1241 = vmatpush1.msra.mxu0 %v27
    %1242 = vmatprep.subr.mxu0 0.0
    %1243 = vmatpush1.msra.mxu0 0.0
    %1244 = vmatprep.subr.mxu0 0.0
    %1245 = vmatpush1.msra.mxu0 0.0
    %1246 = vmatprep.subr.mxu0 0.0
    %1247 = vmatpush1.msra.mxu0 0.0
    %1248 = vmatprep.subr.mxu0 0.0
    %1249 = vmatpush1.msra.mxu0 0.0
    %1250 = vmatprep.subr.mxu0 0.0
    %1251 = vmatpush1.msra.mxu0 0.0
    %1252 = vmatprep.subr.mxu0 0.0
    %1253 = vmatpush1.msra.mxu0 0.0
    %1254 = vmatprep.subr.mxu0 0.0
    %1255 = vmatpush1.msra.mxu0 0.0
    %1256 = vmatprep.subr.mxu0 0.0
    %1257 = vmatpush1.msra.mxu0 0.0
    %1258 = vmatprep.subr.mxu0 0.0
    %1259 = vmatpush1.msra.mxu0 0.0
    %1260 = vmatprep.subr.mxu0 0.0
    %1261 = vmatpush1.msra.mxu0 0.0
    %1262 = vmatprep.subr.mxu0 0.0
    %1263 = vmatpush1.msra.mxu0 0.0
    %1264 = vmatprep.subr.mxu0 0.0
    %1265 = vmatpush1.msra.mxu0 0.0
    %1266 = vmatprep.subr.mxu0 0.0
    %1267 = vmatpush1.msra.mxu0 0.0
    %1268 = vmatprep.subr.mxu0 0.0
    %1269 = vmatpush1.msra.mxu0 0.0
    %1270 = vmatprep.subr.mxu0 0.0
    %1271 = vmatpush1.msra.mxu0 0.0
    %1272 = vmatprep.subr.mxu0 0.0
    %1273 = vmatpush1.msra.mxu0 0.0
    %1274 = vmatprep.subr.mxu0 0.0
    %1275 = vmatpush1.msra.mxu0 0.0
    %1276 = vmatprep.subr.mxu0 0.0
    %1277 = vmatpush1.msra.mxu0 0.0
    %1278 = vmatprep.subr.mxu0 0.0
    %1279 = vmatpush1.msra.mxu0 0.0
    %1280 = vmatprep.subr.mxu0 0.0
    %1281 = vmatpush1.msra.mxu0 0.0
    %1282 = vmatprep.subr.mxu0 0.0
    %1283 = vmatpush1.msra.mxu0 0.0
    %1284 = vmatprep.subr.mxu0 0.0
    %1285 = vmatpush1.msra.mxu0 0.0
    %1286 = vmatprep.subr.mxu0 0.0
    %1287 = vmatpush1.msra.mxu0 0.0
    %1288 = vmatprep.subr.mxu0 0.0
    %1289 = vmatpush1.msra.mxu0 0.0
    %1290 = vmatprep.subr.mxu0 0.0
    %1291 = vmatpush1.msra.mxu0 0.0
    %1292 = vmatprep.subr.mxu0 0.0
    %1293 = vmatpush1.msra.mxu0 0.0
    %1294 = vmatprep.subr.mxu0 0.0
    %1295 = vmatpush1.msra.mxu0 0.0
    %1296 = vmatprep.subr.mxu0 0.0
    %1297 = vmatpush1.msra.mxu0 0.0
    %1298 = vmatprep.mubr.f32.mxu0 0.0
    %1299 = vmatmul.mubr.f32.gmra.mrb[0].mxu0 %v1137
    %v1300 = vpop.f32.mrb[0].mxu0
    %v1301 = vadd.f32 0.0, %v1300
    %v1302 = vpop.f32.mrb[0].mxu0
    %1303 = vdwg.mxu0
    %1305 = vrot.lane.b32.xlu0 %v1233, 32
    %v1306 = vpop.permute.xlu0 %1305
    %v1307 = vsel %vm46, %v1306, 0
    %1309 = vmatprep.subr.mxu0 0.0
    %1310 = vmatpush1.msra.mxu0 %v32
    %1311 = vmatprep.subr.mxu0 0.0
    %1312 = vmatpush1.msra.mxu0 %v33
    %1313 = vmatprep.subr.mxu0 0.0
    %1314 = vmatpush1.msra.mxu0 %v34
    %1315 = vmatprep.subr.mxu0 0.0
    %1316 = vmatpush1.msra.mxu0 %v35
    %1317 = vmatprep.subr.mxu0 0.0
    %1318 = vmatpush1.msra.mxu0 0.0
    %1319 = vmatprep.subr.mxu0 0.0
    %1320 = vmatpush1.msra.mxu0 0.0
    %1321 = vmatprep.subr.mxu0 0.0
    %1322 = vmatpush1.msra.mxu0 0.0
    %1323 = vmatprep.subr.mxu0 0.0
    %1324 = vmatpush1.msra.mxu0 0.0
    %1325 = vmatprep.subr.mxu0 0.0
    %1326 = vmatpush1.msra.mxu0 0.0
    %1327 = vmatprep.subr.mxu0 0.0
    %1328 = vmatpush1.msra.mxu0 0.0
    %1329 = vmatprep.subr.mxu0 0.0
    %1330 = vmatpush1.msra.mxu0 0.0
    %1331 = vmatprep.subr.mxu0 0.0
    %1332 = vmatpush1.msra.mxu0 0.0
    %1333 = vmatprep.subr.mxu0 0.0
    %1334 = vmatpush1.msra.mxu0 0.0
    %1335 = vmatprep.subr.mxu0 0.0
    %1336 = vmatpush1.msra.mxu0 0.0
    %1337 = vmatprep.subr.mxu0 0.0
    %1338 = vmatpush1.msra.mxu0 0.0
    %1339 = vmatprep.subr.mxu0 0.0
    %1340 = vmatpush1.msra.mxu0 0.0
    %1341 = vmatprep.subr.mxu0 0.0
    %1342 = vmatpush1.msra.mxu0 0.0
    %1343 = vmatprep.subr.mxu0 0.0
    %1344 = vmatpush1.msra.mxu0 0.0
    %1345 = vmatprep.subr.mxu0 0.0
    %1346 = vmatpush1.msra.mxu0 0.0
    %1347 = vmatprep.subr.mxu0 0.0
    %1348 = vmatpush1.msra.mxu0 0.0
    %1349 = vmatprep.subr.mxu0 0.0
    %1350 = vmatpush1.msra.mxu0 0.0
    %1351 = vmatprep.subr.mxu0 0.0
    %1352 = vmatpush1.msra.mxu0 0.0
    %1353 = vmatprep.subr.mxu0 0.0
    %1354 = vmatpush1.msra.mxu0 0.0
    %1355 = vmatprep.subr.mxu0 0.0
    %1356 = vmatpush1.msra.mxu0 0.0
    %1357 = vmatprep.subr.mxu0 0.0
    %1358 = vmatpush1.msra.mxu0 0.0
    %1359 = vmatprep.subr.mxu0 0.0
    %1360 = vmatpush1.msra.mxu0 0.0
    %1361 = vmatprep.subr.mxu0 0.0
    %1362 = vmatpush1.msra.mxu0 0.0
    %1363 = vmatprep.subr.mxu0 0.0
    %1364 = vmatpush1.msra.mxu0 0.0
    %1365 = vmatprep.subr.mxu0 0.0
    %1366 = vmatpush1.msra.mxu0 0.0
    %1367 = vmatprep.subr.mxu0 0.0
    %1368 = vmatpush1.msra.mxu0 0.0
    %1369 = vmatprep.subr.mxu0 0.0
    %1370 = vmatpush1.msra.mxu0 0.0
    %1371 = vmatprep.subr.mxu0 0.0
    %1372 = vmatpush1.msra.mxu0 0.0
    %1373 = vmatprep.mubr.f32.mxu0 0.0
    %1374 = vmatmul.mubr.f32.gmra.mrb[0].mxu0 %v1307
    %v1375 = vpop.f32.mrb[0].mxu0
    %v1376 = vadd.f32 0.0, %v1375
    %v1377 = vpop.f32.mrb[0].mxu0
    %1378 = vdwg.mxu0
    %v1380 = vrot.slane %v1301, 4
    %v1382 = vadd.f32 %v117, %v1380
    %v1383 = vxor.u32 %v1382, 2147483648
    %v1384 = vmul.f32 %v1383, 1.442695
    %v1385 = vpow.pop %v1384
    %v1386 = vadd.f32 %v1385, 1.0
    %v1387 = vrcp.pop %v1386
    %v1388 = vmul.f32 1.0, %v1387
    %v1389 = vtanh.pop %v1382
    %v1391 = vrot.slane %v1126, 7
    %v1393 = vmul.f32 %v1388, %v1391
    %1395 = vrot.lane.b32.xlu0 %v1389, 64
    %v1396 = vpop.permute.xlu0 %1395
    %v1398 = vmul.f32 %v1388, %v1396
    %1400 = vrot.lane.b32.xlu0 %v1398, 32
    %v1401 = vpop.permute.xlu0 %1400
    %v1403 = vadd.f32 %v1393, %v1401
    %v1404 = vtanh.pop %v1403
    %1406 = vrot.lane.b32.xlu0 %v1404, 64
    %v1407 = vpop.permute.xlu0 %1406
    %v1409 = vmul.f32 %v1388, %v1407
    %v1411 = vrot.slane %v1409, 4
    %1412 = vrot.lane.b32.xlu0 %v1411, 32
    %v1413 = vpop.permute.xlu0 %1412
    %v1414 = vsel %vm46, %v1413, 0
    %1416 = vmatprep.subr.mxu0 0.0
    %1417 = vmatpush1.msra.mxu0 %v28
    %1418 = vmatprep.subr.mxu0 0.0
    %1419 = vmatpush1.msra.mxu0 %v29
    %1420 = vmatprep.subr.mxu0 0.0
    %1421 = vmatpush1.msra.mxu0 %v30
    %1422 = vmatprep.subr.mxu0 0.0
    %1423 = vmatpush1.msra.mxu0 %v31
    %1424 = vmatprep.subr.mxu0 0.0
    %1425 = vmatpush1.msra.mxu0 0.0
    %1426 = vmatprep.subr.mxu0 0.0
    %1427 = vmatpush1.msra.mxu0 0.0
    %1428 = vmatprep.subr.mxu0 0.0
    %1429 = vmatpush1.msra.mxu0 0.0
    %1430 = vmatprep.subr.mxu0 0.0
    %1431 = vmatpush1.msra.mxu0 0.0
    %1432 = vmatprep.subr.mxu0 0.0
    %1433 = vmatpush1.msra.mxu0 0.0
    %1434 = vmatprep.subr.mxu0 0.0
    %1435 = vmatpush1.msra.mxu0 0.0
    %1436 = vmatprep.subr.mxu0 0.0
    %1437 = vmatpush1.msra.mxu0 0.0
    %1438 = vmatprep.subr.mxu0 0.0
    %1439 = vmatpush1.msra.mxu0 0.0
    %1440 = vmatprep.subr.mxu0 0.0
    %1441 = vmatpush1.msra.mxu0 0.0
    %1442 = vmatprep.subr.mxu0 0.0
    %1443 = vmatpush1.msra.mxu0 0.0
    %1444 = vmatprep.subr.mxu0 0.0
    %1445 = vmatpush1.msra.mxu0 0.0
    %1446 = vmatprep.subr.mxu0 0.0
    %1447 = vmatpush1.msra.mxu0 0.0
    %1448 = vmatprep.subr.mxu0 0.0
    %1449 = vmatpush1.msra.mxu0 0.0
    %1450 = vmatprep.subr.mxu0 0.0
    %1451 = vmatpush1.msra.mxu0 0.0
    %1452 = vmatprep.subr.mxu0 0.0
    %1453 = vmatpush1.msra.mxu0 0.0
    %1454 = vmatprep.subr.mxu0 0.0
    %1455 = vmatpush1.msra.mxu0 0.0
    %1456 = vmatprep.subr.mxu0 0.0
    %1457 = vmatpush1.msra.mxu0 0.0
    %1458 = vmatprep.subr.mxu0 0.0
    %1459 = vmatpush1.msra.mxu0 0.0
    %1460 = vmatprep.subr.mxu0 0.0
    %1461 = vmatpush1.msra.mxu0 0.0
    %1462 = vmatprep.subr.mxu0 0.0
    %1463 = vmatpush1.msra.mxu0 0.0
    %1464 = vmatprep.subr.mxu0 0.0
    %1465 = vmatpush1.msra.mxu0 0.0
    %1466 = vmatprep.subr.mxu0 0.0
    %1467 = vmatpush1.msra.mxu0 0.0
    %1468 = vmatprep.subr.mxu0 0.0
    %1469 = vmatpush1.msra.mxu0 0.0
    %1470 = vmatprep.subr.mxu0 0.0
    %1471 = vmatpush1.msra.mxu0 0.0
    %1472 = vmatprep.subr.mxu0 0.0
    %1473 = vmatpush1.msra.mxu0 0.0
    %1474 = vmatprep.subr.mxu0 0.0
    %1475 = vmatpush1.msra.mxu0 0.0
    %1476 = vmatprep.subr.mxu0 0.0
    %1477 = vmatpush1.msra.mxu0 0.0
    %1478 = vmatprep.subr.mxu0 0.0
    %1479 = vmatpush1.msra.mxu0 0.0
    %1480 = vmatprep.mubr.f32.mxu0 0.0
    %1481 = vmatmul.mubr.f32.gmra.mrb[0].mxu0 %v1414
    %v1482 = vpop.f32.mrb[0].mxu0
    %v1483 = vadd.f32 %v1376, %v1482
    %v1484 = vpop.f32.mrb[0].mxu0
    %1485 = vdwg.mxu0
    %v1486 = vadd.f32 %v1483, %v372
    %v1487 = vxor.u32 %v1486, 2147483648
    %v1488 = vmul.f32 %v1487, 1.442695
    %v1489 = vpow.pop %v1488
    %v1490 = vadd.f32 %v1489, 1.0
    %v1491 = vrcp.pop %v1490
    %v1492 = vmul.f32 1.0, %v1491
    %v1493 = vtanh.pop %v1486
    %v1494 = vmul.f32 %v1492, %v1227
    %1496 = vrot.lane.b32.xlu0 %v1493, 64
    %v1497 = vpop.permute.xlu0 %1496
    %v1499 = vmul.f32 %v1492, %v1497
    %1501 = vrot.lane.b32.xlu0 %v1499, 32
    %v1502 = vpop.permute.xlu0 %1501
    %v1504 = vadd.f32 %v1494, %v1502
    %v1505 = vtanh.pop %v1504
    %1507 = vrot.lane.b32.xlu0 %v1505, 64
    %v1508 = vpop.permute.xlu0 %1507
    %v1510 = vmul.f32 %v1492, %v1508
    %1511 = vmatprep.subr.mxu0 0.0
    %1512 = vmatpush1.msra.mxu0 %v24
    %1513 = vmatprep.subr.mxu0 0.0
    %1514 = vmatpush1.msra.mxu0 %v25
    %1515 = vmatprep.subr.mxu0 0.0
    %1516 = vmatpush1.msra.mxu0 %v26
    %1517 = vmatprep.subr.mxu0 0.0
    %1518 = vmatpush1.msra.mxu0 %v27
    %1519 = vmatprep.subr.mxu0 0.0
    %1520 = vmatpush1.msra.mxu0 0.0
    %1521 = vmatprep.subr.mxu0 0.0
    %1522 = vmatpush1.msra.mxu0 0.0
    %1523 = vmatprep.subr.mxu0 0.0
    %1524 = vmatpush1.msra.mxu0 0.0
    %1525 = vmatprep.subr.mxu0 0.0
    %1526 = vmatpush1.msra.mxu0 0.0
    %1527 = vmatprep.subr.mxu0 0.0
    %1528 = vmatpush1.msra.mxu0 0.0
    %1529 = vmatprep.subr.mxu0 0.0
    %1530 = vmatpush1.msra.mxu0 0.0
    %1531 = vmatprep.subr.mxu0 0.0
    %1532 = vmatpush1.msra.mxu0 0.0
    %1533 = vmatprep.subr.mxu0 0.0
    %1534 = vmatpush1.msra.mxu0 0.0
    %1535 = vmatprep.subr.mxu0 0.0
    %1536 = vmatpush1.msra.mxu0 0.0
    %1537 = vmatprep.subr.mxu0 0.0
    %1538 = vmatpush1.msra.mxu0 0.0
    %1539 = vmatprep.subr.mxu0 0.0
    %1540 = vmatpush1.msra.mxu0 0.0
    %1541 = vmatprep.subr.mxu0 0.0
    %1542 = vmatpush1.msra.mxu0 0.0
    %1543 = vmatprep.subr.mxu0 0.0
    %1544 = vmatpush1.msra.mxu0 0.0
    %1545 = vmatprep.subr.mxu0 0.0
    %1546 = vmatpush1.msra.mxu0 0.0
    %1547 = vmatprep.subr.mxu0 0.0
    %1548 = vmatpush1.msra.mxu0 0.0
    %1549 = vmatprep.subr.mxu0 0.0
    %1550 = vmatpush1.msra.mxu0 0.0
    %1551 = vmatprep.subr.mxu0 0.0
    %1552 = vmatpush1.msra.mxu0 0.0
    %1553 = vmatprep.subr.mxu0 0.0
    %1554 = vmatpush1.msra.mxu0 0.0
    %1555 = vmatprep.subr.mxu0 0.0
    %1556 = vmatpush1.msra.mxu0 0.0
    %1557 = vmatprep.subr.mxu0 0.0
    %1558 = vmatpush1.msra.mxu0 0.0
    %1559 = vmatprep.subr.mxu0 0.0
    %1560 = vmatpush1.msra.mxu0 0.0
    %1561 = vmatprep.subr.mxu0 0.0
    %1562 = vmatpush1.msra.mxu0 0.0
    %1563 = vmatprep.subr.mxu0 0.0
    %1564 = vmatpush1.msra.mxu0 0.0
    %1565 = vmatprep.subr.mxu0 0.0
    %1566 = vmatpush1.msra.mxu0 0.0
    %1567 = vmatprep.subr.mxu0 0.0
    %1568 = vmatpush1.msra.mxu0 0.0
    %1569 = vmatprep.subr.mxu0 0.0
    %1570 = vmatpush1.msra.mxu0 0.0
    %1571 = vmatprep.subr.mxu0 0.0
    %1572 = vmatpush1.msra.mxu0 0.0
    %1573 = vmatprep.subr.mxu0 0.0
    %1574 = vmatpush1.msra.mxu0 0.0
    %1575 = vmatprep.mubr.f32.mxu0 0.0
    %1576 = vmatmul.mubr.f32.gmra.mrb[0].mxu0 %v1414
    %v1577 = vpop.f32.mrb[0].mxu0
    %v1578 = vadd.f32 0.0, %v1577
    %v1579 = vpop.f32.mrb[0].mxu0
    %1580 = vdwg.mxu0
    %1582 = vrot.lane.b32.xlu0 %v1510, 32
    %v1583 = vpop.permute.xlu0 %1582
    %v1584 = vsel %vm46, %v1583, 0
    %1586 = vmatprep.subr.mxu0 0.0
    %1587 = vmatpush1.msra.mxu0 %v32
    %1588 = vmatprep.subr.mxu0 0.0
    %1589 = vmatpush1.msra.mxu0 %v33
    %1590 = vmatprep.subr.mxu0 0.0
    %1591 = vmatpush1.msra.mxu0 %v34
    %1592 = vmatprep.subr.mxu0 0.0
    %1593 = vmatpush1.msra.mxu0 %v35
    %1594 = vmatprep.subr.mxu0 0.0
    %1595 = vmatpush1.msra.mxu0 0.0
    %1596 = vmatprep.subr.mxu0 0.0
    %1597 = vmatpush1.msra.mxu0 0.0
    %1598 = vmatprep.subr.mxu0 0.0
    %1599 = vmatpush1.msra.mxu0 0.0
    %1600 = vmatprep.subr.mxu0 0.0
    %1601 = vmatpush1.msra.mxu0 0.0
    %1602 = vmatprep.subr.mxu0 0.0
    %1603 = vmatpush1.msra.mxu0 0.0
    %1604 = vmatprep.subr.mxu0 0.0
    %1605 = vmatpush1.msra.mxu0 0.0
    %1606 = vmatprep.subr.mxu0 0.0
    %1607 = vmatpush1.msra.mxu0 0.0
    %1608 = vmatprep.subr.mxu0 0.0
    %1609 = vmatpush1.msra.mxu0 0.0
    %1610 = vmatprep.subr.mxu0 0.0
    %1611 = vmatpush1.msra.mxu0 0.0
    %1612 = vmatprep.subr.mxu0 0.0
    %1613 = vmatpush1.msra.mxu0 0.0
    %1614 = vmatprep.subr.mxu0 0.0
    %1615 = vmatpush1.msra.mxu0 0.0
    %1616 = vmatprep.subr.mxu0 0.0
    %1617 = vmatpush1.msra.mxu0 0.0
    %1618 = vmatprep.subr.mxu0 0.0
    %1619 = vmatpush1.msra.mxu0 0.0
    %1620 = vmatprep.subr.mxu0 0.0
    %1621 = vmatpush1.msra.mxu0 0.0
    %1622 = vmatprep.subr.mxu0 0.0
    %1623 = vmatpush1.msra.mxu0 0.0
    %1624 = vmatprep.subr.mxu0 0.0
    %1625 = vmatpush1.msra.mxu0 0.0
    %1626 = vmatprep.subr.mxu0 0.0
    %1627 = vmatpush1.msra.mxu0 0.0
    %1628 = vmatprep.subr.mxu0 0.0
    %1629 = vmatpush1.msra.mxu0 0.0
    %1630 = vmatprep.subr.mxu0 0.0
    %1631 = vmatpush1.msra.mxu0 0.0
    %1632 = vmatprep.subr.mxu0 0.0
    %1633 = vmatpush1.msra.mxu0 0.0
    %1634 = vmatprep.subr.mxu0 0.0
    %1635 = vmatpush1.msra.mxu0 0.0
    %1636 = vmatprep.subr.mxu0 0.0
    %1637 = vmatpush1.msra.mxu0 0.0
    %1638 = vmatprep.subr.mxu0 0.0
    %1639 = vmatpush1.msra.mxu0 0.0
    %1640 = vmatprep.subr.mxu0 0.0
    %1641 = vmatpush1.msra.mxu0 0.0
    %1642 = vmatprep.subr.mxu0 0.0
    %1643 = vmatpush1.msra.mxu0 0.0
    %1644 = vmatprep.subr.mxu0 0.0
    %1645 = vmatpush1.msra.mxu0 0.0
    %1646 = vmatprep.subr.mxu0 0.0
    %1647 = vmatpush1.msra.mxu0 0.0
    %1648 = vmatprep.subr.mxu0 0.0
    %1649 = vmatpush1.msra.mxu0 0.0
    %1650 = vmatprep.mubr.f32.mxu0 0.0
    %1651 = vmatmul.mubr.f32.gmra.mrb[0].mxu0 %v1584
    %v1652 = vpop.f32.mrb[0].mxu0
    %v1653 = vadd.f32 0.0, %v1652
    %v1654 = vpop.f32.mrb[0].mxu0
    %1655 = vdwg.mxu0
    %v1657 = vrot.slane %v1578, 3
    %v1659 = vadd.f32 %v117, %v1657
    %v1660 = vxor.u32 %v1659, 2147483648
    %v1661 = vmul.f32 %v1660, 1.442695
    %v1662 = vpow.pop %v1661
    %v1663 = vadd.f32 %v1662, 1.0
    %v1664 = vrcp.pop %v1663
    %v1665 = vmul.f32 1.0, %v1664
    %v1666 = vtanh.pop %v1659
    %v1668 = vrot.slane %v1403, 7
    %v1670 = vmul.f32 %v1665, %v1668
    %1672 = vrot.lane.b32.xlu0 %v1666, 64
    %v1673 = vpop.permute.xlu0 %1672
    %v1675 = vmul.f32 %v1665, %v1673
    %1677 = vrot.lane.b32.xlu0 %v1675, 32
    %v1678 = vpop.permute.xlu0 %1677
    %v1680 = vadd.f32 %v1670, %v1678
    %v1681 = vtanh.pop %v1680
    %1683 = vrot.lane.b32.xlu0 %v1681, 64
    %v1684 = vpop.permute.xlu0 %1683
    %v1686 = vmul.f32 %v1665, %v1684
    %v1688 = vrot.slane %v1686, 5
    %1689 = vrot.lane.b32.xlu0 %v1688, 32
    %v1690 = vpop.permute.xlu0 %1689
    %v1691 = vsel %vm46, %v1690, 0
    %1693 = vmatprep.subr.mxu0 0.0
    %1694 = vmatpush1.msra.mxu0 %v28
    %1695 = vmatprep.subr.mxu0 0.0
    %1696 = vmatpush1.msra.mxu0 %v29
    %1697 = vmatprep.subr.mxu0 0.0
    %1698 = vmatpush1.msra.mxu0 %v30
    %1699 = vmatprep.subr.mxu0 0.0
    %1700 = vmatpush1.msra.mxu0 %v31
    %1701 = vmatprep.subr.mxu0 0.0
    %1702 = vmatpush1.msra.mxu0 0.0
    %1703 = vmatprep.subr.mxu0 0.0
    %1704 = vmatpush1.msra.mxu0 0.0
    %1705 = vmatprep.subr.mxu0 0.0
    %1706 = vmatpush1.msra.mxu0 0.0
    %1707 = vmatprep.subr.mxu0 0.0
    %1708 = vmatpush1.msra.mxu0 0.0
    %1709 = vmatprep.subr.mxu0 0.0
    %1710 = vmatpush1.msra.mxu0 0.0
    %1711 = vmatprep.subr.mxu0 0.0
    %1712 = vmatpush1.msra.mxu0 0.0
    %1713 = vmatprep.subr.mxu0 0.0
    %1714 = vmatpush1.msra.mxu0 0.0
    %1715 = vmatprep.subr.mxu0 0.0
    %1716 = vmatpush1.msra.mxu0 0.0
    %1717 = vmatprep.subr.mxu0 0.0
    %1718 = vmatpush1.msra.mxu0 0.0
    %1719 = vmatprep.subr.mxu0 0.0
    %1720 = vmatpush1.msra.mxu0 0.0
    %1721 = vmatprep.subr.mxu0 0.0
    %1722 = vmatpush1.msra.mxu0 0.0
    %1723 = vmatprep.subr.mxu0 0.0
    %1724 = vmatpush1.msra.mxu0 0.0
    %1725 = vmatprep.subr.mxu0 0.0
    %1726 = vmatpush1.msra.mxu0 0.0
    %1727 = vmatprep.subr.mxu0 0.0
    %1728 = vmatpush1.msra.mxu0 0.0
    %1729 = vmatprep.subr.mxu0 0.0
    %1730 = vmatpush1.msra.mxu0 0.0
    %1731 = vmatprep.subr.mxu0 0.0
    %1732 = vmatpush1.msra.mxu0 0.0
    %1733 = vmatprep.subr.mxu0 0.0
    %1734 = vmatpush1.msra.mxu0 0.0
    %1735 = vmatprep.subr.mxu0 0.0
    %1736 = vmatpush1.msra.mxu0 0.0
    %1737 = vmatprep.subr.mxu0 0.0
    %1738 = vmatpush1.msra.mxu0 0.0
    %1739 = vmatprep.subr.mxu0 0.0
    %1740 = vmatpush1.msra.mxu0 0.0
    %1741 = vmatprep.subr.mxu0 0.0
    %1742 = vmatpush1.msra.mxu0 0.0
    %1743 = vmatprep.subr.mxu0 0.0
    %1744 = vmatpush1.msra.mxu0 0.0
    %1745 = vmatprep.subr.mxu0 0.0
    %1746 = vmatpush1.msra.mxu0 0.0
    %1747 = vmatprep.subr.mxu0 0.0
    %1748 = vmatpush1.msra.mxu0 0.0
    %1749 = vmatprep.subr.mxu0 0.0
    %1750 = vmatpush1.msra.mxu0 0.0
    %1751 = vmatprep.subr.mxu0 0.0
    %1752 = vmatpush1.msra.mxu0 0.0
    %1753 = vmatprep.subr.mxu0 0.0
    %1754 = vmatpush1.msra.mxu0 0.0
    %1755 = vmatprep.subr.mxu0 0.0
    %1756 = vmatpush1.msra.mxu0 0.0
    %1757 = vmatprep.mubr.f32.mxu0 0.0
    %1758 = vmatmul.mubr.f32.gmra.mrb[0].mxu0 %v1691
    %v1759 = vpop.f32.mrb[0].mxu0
    %v1760 = vadd.f32 %v1653, %v1759
    %v1761 = vpop.f32.mrb[0].mxu0
    %1762 = vdwg.mxu0
    %v1763 = vadd.f32 %v1760, %v372
    %v1764 = vxor.u32 %v1763, 2147483648
    %v1765 = vmul.f32 %v1764, 1.442695
    %v1766 = vpow.pop %v1765
    %v1767 = vadd.f32 %v1766, 1.0
    %v1768 = vrcp.pop %v1767
    %v1769 = vmul.f32 1.0, %v1768
    %v1770 = vtanh.pop %v1763
    %v1771 = vmul.f32 %v1769, %v1504
    %1773 = vrot.lane.b32.xlu0 %v1770, 64
    %v1774 = vpop.permute.xlu0 %1773
    %v1776 = vmul.f32 %v1769, %v1774
    %1778 = vrot.lane.b32.xlu0 %v1776, 32
    %v1779 = vpop.permute.xlu0 %1778
    %v1781 = vadd.f32 %v1771, %v1779
    %v1782 = vtanh.pop %v1781
    %1784 = vrot.lane.b32.xlu0 %v1782, 64
    %v1785 = vpop.permute.xlu0 %1784
    %v1787 = vmul.f32 %v1769, %v1785
    %1788 = vmatprep.subr.mxu0 0.0
    %1789 = vmatpush1.msra.mxu0 %v24
    %1790 = vmatprep.subr.mxu0 0.0
    %1791 = vmatpush1.msra.mxu0 %v25
    %1792 = vmatprep.subr.mxu0 0.0
    %1793 = vmatpush1.msra.mxu0 %v26
    %1794 = vmatprep.subr.mxu0 0.0
    %1795 = vmatpush1.msra.mxu0 %v27
    %1796 = vmatprep.subr.mxu0 0.0
    %1797 = vmatpush1.msra.mxu0 0.0
    %1798 = vmatprep.subr.mxu0 0.0
    %1799 = vmatpush1.msra.mxu0 0.0
    %1800 = vmatprep.subr.mxu0 0.0
    %1801 = vmatpush1.msra.mxu0 0.0
    %1802 = vmatprep.subr.mxu0 0.0
    %1803 = vmatpush1.msra.mxu0 0.0
    %1804 = vmatprep.subr.mxu0 0.0
    %1805 = vmatpush1.msra.mxu0 0.0
    %1806 = vmatprep.subr.mxu0 0.0
    %1807 = vmatpush1.msra.mxu0 0.0
    %1808 = vmatprep.subr.mxu0 0.0
    %1809 = vmatpush1.msra.mxu0 0.0
    %1810 = vmatprep.subr.mxu0 0.0
    %1811 = vmatpush1.msra.mxu0 0.0
    %1812 = vmatprep.subr.mxu0 0.0
    %1813 = vmatpush1.msra.mxu0 0.0
    %1814 = vmatprep.subr.mxu0 0.0
    %1815 = vmatpush1.msra.mxu0 0.0
    %1816 = vmatprep.subr.mxu0 0.0
    %1817 = vmatpush1.msra.mxu0 0.0
    %1818 = vmatprep.subr.mxu0 0.0
    %1819 = vmatpush1.msra.mxu0 0.0
    %1820 = vmatprep.subr.mxu0 0.0
    %1821 = vmatpush1.msra.mxu0 0.0
    %1822 = vmatprep.subr.mxu0 0.0
    %1823 = vmatpush1.msra.mxu0 0.0
    %1824 = vmatprep.subr.mxu0 0.0
    %1825 = vmatpush1.msra.mxu0 0.0
    %1826 = vmatprep.subr.mxu0 0.0
    %1827 = vmatpush1.msra.mxu0 0.0
    %1828 = vmatprep.subr.mxu0 0.0
    %1829 = vmatpush1.msra.mxu0 0.0
    %1830 = vmatprep.subr.mxu0 0.0
    %1831 = vmatpush1.msra.mxu0 0.0
    %1832 = vmatprep.subr.mxu0 0.0
    %1833 = vmatpush1.msra.mxu0 0.0
    %1834 = vmatprep.subr.mxu0 0.0
    %1835 = vmatpush1.msra.mxu0 0.0
    %1836 = vmatprep.subr.mxu0 0.0
    %1837 = vmatpush1.msra.mxu0 0.0
    %1838 = vmatprep.subr.mxu0 0.0
    %1839 = vmatpush1.msra.mxu0 0.0
    %1840 = vmatprep.subr.mxu0 0.0
    %1841 = vmatpush1.msra.mxu0 0.0
    %1842 = vmatprep.subr.mxu0 0.0
    %1843 = vmatpush1.msra.mxu0 0.0
    %1844 = vmatprep.subr.mxu0 0.0
    %1845 = vmatpush1.msra.mxu0 0.0
    %1846 = vmatprep.subr.mxu0 0.0
    %1847 = vmatpush1.msra.mxu0 0.0
    %1848 = vmatprep.subr.mxu0 0.0
    %1849 = vmatpush1.msra.mxu0 0.0
    %1850 = vmatprep.subr.mxu0 0.0
    %1851 = vmatpush1.msra.mxu0 0.0
    %1852 = vmatprep.mubr.f32.mxu0 0.0
    %1853 = vmatmul.mubr.f32.gmra.mrb[0].mxu0 %v1691
    %v1854 = vpop.f32.mrb[0].mxu0
    %v1855 = vadd.f32 0.0, %v1854
    %v1856 = vpop.f32.mrb[0].mxu0
    %1857 = vdwg.mxu0
    %1859 = vrot.lane.b32.xlu0 %v1787, 32
    %v1860 = vpop.permute.xlu0 %1859
    %v1861 = vsel %vm46, %v1860, 0
    %1863 = vmatprep.subr.mxu0 0.0
    %1864 = vmatpush1.msra.mxu0 %v32
    %1865 = vmatprep.subr.mxu0 0.0
    %1866 = vmatpush1.msra.mxu0 %v33
    %1867 = vmatprep.subr.mxu0 0.0
    %1868 = vmatpush1.msra.mxu0 %v34
    %1869 = vmatprep.subr.mxu0 0.0
    %1870 = vmatpush1.msra.mxu0 %v35
    %1871 = vmatprep.subr.mxu0 0.0
    %1872 = vmatpush1.msra.mxu0 0.0
    %1873 = vmatprep.subr.mxu0 0.0
    %1874 = vmatpush1.msra.mxu0 0.0
    %1875 = vmatprep.subr.mxu0 0.0
    %1876 = vmatpush1.msra.mxu0 0.0
    %1877 = vmatprep.subr.mxu0 0.0
    %1878 = vmatpush1.msra.mxu0 0.0
    %1879 = vmatprep.subr.mxu0 0.0
    %1880 = vmatpush1.msra.mxu0 0.0
    %1881 = vmatprep.subr.mxu0 0.0
    %1882 = vmatpush1.msra.mxu0 0.0
    %1883 = vmatprep.subr.mxu0 0.0
    %1884 = vmatpush1.msra.mxu0 0.0
    %1885 = vmatprep.subr.mxu0 0.0
    %1886 = vmatpush1.msra.mxu0 0.0
    %1887 = vmatprep.subr.mxu0 0.0
    %1888 = vmatpush1.msra.mxu0 0.0
    %1889 = vmatprep.subr.mxu0 0.0
    %1890 = vmatpush1.msra.mxu0 0.0
    %1891 = vmatprep.subr.mxu0 0.0
    %1892 = vmatpush1.msra.mxu0 0.0
    %1893 = vmatprep.subr.mxu0 0.0
    %1894 = vmatpush1.msra.mxu0 0.0
    %1895 = vmatprep.subr.mxu0 0.0
    %1896 = vmatpush1.msra.mxu0 0.0
    %1897 = vmatprep.subr.mxu0 0.0
    %1898 = vmatpush1.msra.mxu0 0.0
    %1899 = vmatprep.subr.mxu0 0.0
    %1900 = vmatpush1.msra.mxu0 0.0
    %1901 = vmatprep.subr.mxu0 0.0
    %1902 = vmatpush1.msra.mxu0 0.0
    %1903 = vmatprep.subr.mxu0 0.0
    %1904 = vmatpush1.msra.mxu0 0.0
    %1905 = vmatprep.subr.mxu0 0.0
    %1906 = vmatpush1.msra.mxu0 0.0
    %1907 = vmatprep.subr.mxu0 0.0
    %1908 = vmatpush1.msra.mxu0 0.0
    %1909 = vmatprep.subr.mxu0 0.0
    %1910 = vmatpush1.msra.mxu0 0.0
    %1911 = vmatprep.subr.mxu0 0.0
    %1912 = vmatpush1.msra.mxu0 0.0
    %1913 = vmatprep.subr.mxu0 0.0
    %1914 = vmatpush1.msra.mxu0 0.0
    %1915 = vmatprep.subr.mxu0 0.0
    %1916 = vmatpush1.msra.mxu0 0.0
    %1917 = vmatprep.subr.mxu0 0.0
    %1918 = vmatpush1.msra.mxu0 0.0
    %1919 = vmatprep.subr.mxu0 0.0
    %1920 = vmatpush1.msra.mxu0 0.0
    %1921 = vmatprep.subr.mxu0 0.0
    %1922 = vmatpush1.msra.mxu0 0.0
    %1923 = vmatprep.subr.mxu0 0.0
    %1924 = vmatpush1.msra.mxu0 0.0
    %1925 = vmatprep.subr.mxu0 0.0
    %1926 = vmatpush1.msra.mxu0 0.0
    %1927 = vmatprep.mubr.f32.mxu0 0.0
    %1928 = vmatmul.mubr.f32.gmra.mrb[0].mxu0 %v1861
    %v1929 = vpop.f32.mrb[0].mxu0
    %v1930 = vadd.f32 0.0, %v1929
    %v1931 = vpop.f32.mrb[0].mxu0
    %1932 = vdwg.mxu0
    %v1934 = vrot.slane %v1855, 2
    %v1936 = vadd.f32 %v117, %v1934
    %v1937 = vxor.u32 %v1936, 2147483648
    %v1938 = vmul.f32 %v1937, 1.442695
    %v1939 = vpow.pop %v1938
    %v1940 = vadd.f32 %v1939, 1.0
    %v1941 = vrcp.pop %v1940
    %v1942 = vmul.f32 1.0, %v1941
    %v1943 = vtanh.pop %v1936
    %v1945 = vrot.slane %v1680, 7
    %v1947 = vmul.f32 %v1942, %v1945
    %1949 = vrot.lane.b32.xlu0 %v1943, 64
    %v1950 = vpop.permute.xlu0 %1949
    %v1952 = vmul.f32 %v1942, %v1950
    %1954 = vrot.lane.b32.xlu0 %v1952, 32
    %v1955 = vpop.permute.xlu0 %1954
    %v1957 = vadd.f32 %v1947, %v1955
    %v1958 = vtanh.pop %v1957
    %1960 = vrot.lane.b32.xlu0 %v1958, 64
    %v1961 = vpop.permute.xlu0 %1960
    %v1963 = vmul.f32 %v1942, %v1961
    %v1965 = vrot.slane %v1963, 6
    %1966 = vrot.lane.b32.xlu0 %v1965, 32
    %v1967 = vpop.permute.xlu0 %1966
    %v1968 = vsel %vm46, %v1967, 0
    %1970 = vmatprep.subr.mxu0 0.0
    %1971 = vmatpush1.msra.mxu0 %v28
    %1972 = vmatprep.subr.mxu0 0.0
    %1973 = vmatpush1.msra.mxu0 %v29
    %1974 = vmatprep.subr.mxu0 0.0
    %1975 = vmatpush1.msra.mxu0 %v30
    %1976 = vmatprep.subr.mxu0 0.0
    %1977 = vmatpush1.msra.mxu0 %v31
    %1978 = vmatprep.subr.mxu0 0.0
    %1979 = vmatpush1.msra.mxu0 0.0
    %1980 = vmatprep.subr.mxu0 0.0
    %1981 = vmatpush1.msra.mxu0 0.0
    %1982 = vmatprep.subr.mxu0 0.0
    %1983 = vmatpush1.msra.mxu0 0.0
    %1984 = vmatprep.subr.mxu0 0.0
    %1985 = vmatpush1.msra.mxu0 0.0
    %1986 = vmatprep.subr.mxu0 0.0
    %1987 = vmatpush1.msra.mxu0 0.0
    %1988 = vmatprep.subr.mxu0 0.0
    %1989 = vmatpush1.msra.mxu0 0.0
    %1990 = vmatprep.subr.mxu0 0.0
    %1991 = vmatpush1.msra.mxu0 0.0
    %1992 = vmatprep.subr.mxu0 0.0
    %1993 = vmatpush1.msra.mxu0 0.0
    %1994 = vmatprep.subr.mxu0 0.0
    %1995 = vmatpush1.msra.mxu0 0.0
    %1996 = vmatprep.subr.mxu0 0.0
    %1997 = vmatpush1.msra.mxu0 0.0
    %1998 = vmatprep.subr.mxu0 0.0
    %1999 = vmatpush1.msra.mxu0 0.0
    %2000 = vmatprep.subr.mxu0 0.0
    %2001 = vmatpush1.msra.mxu0 0.0
    %2002 = vmatprep.subr.mxu0 0.0
    %2003 = vmatpush1.msra.mxu0 0.0
    %2004 = vmatprep.subr.mxu0 0.0
    %2005 = vmatpush1.msra.mxu0 0.0
    %2006 = vmatprep.subr.mxu0 0.0
    %2007 = vmatpush1.msra.mxu0 0.0
    %2008 = vmatprep.subr.mxu0 0.0
    %2009 = vmatpush1.msra.mxu0 0.0
    %2010 = vmatprep.subr.mxu0 0.0
    %2011 = vmatpush1.msra.mxu0 0.0
    %2012 = vmatprep.subr.mxu0 0.0
    %2013 = vmatpush1.msra.mxu0 0.0
    %2014 = vmatprep.subr.mxu0 0.0
    %2015 = vmatpush1.msra.mxu0 0.0
    %2016 = vmatprep.subr.mxu0 0.0
    %2017 = vmatpush1.msra.mxu0 0.0
    %2018 = vmatprep.subr.mxu0 0.0
    %2019 = vmatpush1.msra.mxu0 0.0
    %2020 = vmatprep.subr.mxu0 0.0
    %2021 = vmatpush1.msra.mxu0 0.0
    %2022 = vmatprep.subr.mxu0 0.0
    %2023 = vmatpush1.msra.mxu0 0.0
    %2024 = vmatprep.subr.mxu0 0.0
    %2025 = vmatpush1.msra.mxu0 0.0
    %2026 = vmatprep.subr.mxu0 0.0
    %2027 = vmatpush1.msra.mxu0 0.0
    %2028 = vmatprep.subr.mxu0 0.0
    %2029 = vmatpush1.msra.mxu0 0.0
    %2030 = vmatprep.subr.mxu0 0.0
    %2031 = vmatpush1.msra.mxu0 0.0
    %2032 = vmatprep.subr.mxu0 0.0
    %2033 = vmatpush1.msra.mxu0 0.0
    %2034 = vmatprep.mubr.f32.mxu0 0.0
    %2035 = vmatmul.mubr.f32.gmra.mrb[0].mxu0 %v1968
    %v2036 = vpop.f32.mrb[0].mxu0
    %v2037 = vadd.f32 %v1930, %v2036
    %v2038 = vpop.f32.mrb[0].mxu0
    %2039 = vdwg.mxu0
    %v2040 = vadd.f32 %v2037, %v372
    %v2041 = vxor.u32 %v2040, 2147483648
    %v2042 = vmul.f32 %v2041, 1.442695
    %v2043 = vpow.pop %v2042
    %v2044 = vadd.f32 %v2043, 1.0
    %v2045 = vrcp.pop %v2044
    %v2046 = vmul.f32 1.0, %v2045
    %v2047 = vtanh.pop %v2040
    %v2048 = vmul.f32 %v2046, %v1781
    %2050 = vrot.lane.b32.xlu0 %v2047, 64
    %v2051 = vpop.permute.xlu0 %2050
    %v2053 = vmul.f32 %v2046, %v2051
    %2055 = vrot.lane.b32.xlu0 %v2053, 32
    %v2056 = vpop.permute.xlu0 %2055
    %v2058 = vadd.f32 %v2048, %v2056
    %v2059 = vtanh.pop %v2058
    %2061 = vrot.lane.b32.xlu0 %v2059, 64
    %v2062 = vpop.permute.xlu0 %2061
    %v2064 = vmul.f32 %v2046, %v2062
    %2065 = vmatprep.subr.mxu0 0.0
    %2066 = vmatpush1.msra.mxu0 %v24
    %2067 = vmatprep.subr.mxu0 0.0
    %2068 = vmatpush1.msra.mxu0 %v25
    %2069 = vmatprep.subr.mxu0 0.0
    %2070 = vmatpush1.msra.mxu0 %v26
    %2071 = vmatprep.subr.mxu0 0.0
    %2072 = vmatpush1.msra.mxu0 %v27
    %2073 = vmatprep.subr.mxu0 0.0
    %2074 = vmatpush1.msra.mxu0 0.0
    %2075 = vmatprep.subr.mxu0 0.0
    %2076 = vmatpush1.msra.mxu0 0.0
    %2077 = vmatprep.subr.mxu0 0.0
    %2078 = vmatpush1.msra.mxu0 0.0
    %2079 = vmatprep.subr.mxu0 0.0
    %2080 = vmatpush1.msra.mxu0 0.0
    %2081 = vmatprep.subr.mxu0 0.0
    %2082 = vmatpush1.msra.mxu0 0.0
    %2083 = vmatprep.subr.mxu0 0.0
    %2084 = vmatpush1.msra.mxu0 0.0
    %2085 = vmatprep.subr.mxu0 0.0
    %2086 = vmatpush1.msra.mxu0 0.0
    %2087 = vmatprep.subr.mxu0 0.0
    %2088 = vmatpush1.msra.mxu0 0.0
    %2089 = vmatprep.subr.mxu0 0.0
    %2090 = vmatpush1.msra.mxu0 0.0
    %2091 = vmatprep.subr.mxu0 0.0
    %2092 = vmatpush1.msra.mxu0 0.0
    %2093 = vmatprep.subr.mxu0 0.0
    %2094 = vmatpush1.msra.mxu0 0.0
    %2095 = vmatprep.subr.mxu0 0.0
    %2096 = vmatpush1.msra.mxu0 0.0
    %2097 = vmatprep.subr.mxu0 0.0
    %2098 = vmatpush1.msra.mxu0 0.0
    %2099 = vmatprep.subr.mxu0 0.0
    %2100 = vmatpush1.msra.mxu0 0.0
    %2101 = vmatprep.subr.mxu0 0.0
    %2102 = vmatpush1.msra.mxu0 0.0
    %2103 = vmatprep.subr.mxu0 0.0
    %2104 = vmatpush1.msra.mxu0 0.0
    %2105 = vmatprep.subr.mxu0 0.0
    %2106 = vmatpush1.msra.mxu0 0.0
    %2107 = vmatprep.subr.mxu0 0.0
    %2108 = vmatpush1.msra.mxu0 0.0
    %2109 = vmatprep.subr.mxu0 0.0
    %2110 = vmatpush1.msra.mxu0 0.0
    %2111 = vmatprep.subr.mxu0 0.0
    %2112 = vmatpush1.msra.mxu0 0.0
    %2113 = vmatprep.subr.mxu0 0.0
    %2114 = vmatpush1.msra.mxu0 0.0
    %2115 = vmatprep.subr.mxu0 0.0
    %2116 = vmatpush1.msra.mxu0 0.0
    %2117 = vmatprep.subr.mxu0 0.0
    %2118 = vmatpush1.msra.mxu0 0.0
    %2119 = vmatprep.subr.mxu0 0.0
    %2120 = vmatpush1.msra.mxu0 0.0
    %2121 = vmatprep.subr.mxu0 0.0
    %2122 = vmatpush1.msra.mxu0 0.0
    %2123 = vmatprep.subr.mxu0 0.0
    %2124 = vmatpush1.msra.mxu0 0.0
    %2125 = vmatprep.subr.mxu0 0.0
    %2126 = vmatpush1.msra.mxu0 0.0
    %2127 = vmatprep.subr.mxu0 0.0
    %2128 = vmatpush1.msra.mxu0 0.0
    %2129 = vmatprep.mubr.f32.mxu0 0.0
    %2130 = vmatmul.mubr.f32.gmra.mrb[0].mxu0 %v1968
    %v2131 = vpop.f32.mrb[0].mxu0
    %v2132 = vadd.f32 0.0, %v2131
    %v2133 = vpop.f32.mrb[0].mxu0
    %2134 = vdwg.mxu0
    %2136 = vrot.lane.b32.xlu0 %v2064, 32
    %v2137 = vpop.permute.xlu0 %2136
    %v2138 = vsel %vm46, %v2137, 0
    %2140 = vmatprep.subr.mxu0 0.0
    %2141 = vmatpush1.msra.mxu0 %v32
    %2142 = vmatprep.subr.mxu0 0.0
    %2143 = vmatpush1.msra.mxu0 %v33
    %2144 = vmatprep.subr.mxu0 0.0
    %2145 = vmatpush1.msra.mxu0 %v34
    %2146 = vmatprep.subr.mxu0 0.0
    %2147 = vmatpush1.msra.mxu0 %v35
    %2148 = vmatprep.subr.mxu0 0.0
    %2149 = vmatpush1.msra.mxu0 0.0
    %2150 = vmatprep.subr.mxu0 0.0
    %2151 = vmatpush1.msra.mxu0 0.0
    %2152 = vmatprep.subr.mxu0 0.0
    %2153 = vmatpush1.msra.mxu0 0.0
    %2154 = vmatprep.subr.mxu0 0.0
    %2155 = vmatpush1.msra.mxu0 0.0
    %2156 = vmatprep.subr.mxu0 0.0
    %2157 = vmatpush1.msra.mxu0 0.0
    %2158 = vmatprep.subr.mxu0 0.0
    %2159 = vmatpush1.msra.mxu0 0.0
    %2160 = vmatprep.subr.mxu0 0.0
    %2161 = vmatpush1.msra.mxu0 0.0
    %2162 = vmatprep.subr.mxu0 0.0
    %2163 = vmatpush1.msra.mxu0 0.0
    %2164 = vmatprep.subr.mxu0 0.0
    %2165 = vmatpush1.msra.mxu0 0.0
    %2166 = vmatprep.subr.mxu0 0.0
    %2167 = vmatpush1.msra.mxu0 0.0
    %2168 = vmatprep.subr.mxu0 0.0
    %2169 = vmatpush1.msra.mxu0 0.0
    %2170 = vmatprep.subr.mxu0 0.0
    %2171 = vmatpush1.msra.mxu0 0.0
    %2172 = vmatprep.subr.mxu0 0.0
    %2173 = vmatpush1.msra.mxu0 0.0
    %2174 = vmatprep.subr.mxu0 0.0
    %2175 = vmatpush1.msra.mxu0 0.0
    %2176 = vmatprep.subr.mxu0 0.0
    %2177 = vmatpush1.msra.mxu0 0.0
    %2178 = vmatprep.subr.mxu0 0.0
    %2179 = vmatpush1.msra.mxu0 0.0
    %2180 = vmatprep.subr.mxu0 0.0
    %2181 = vmatpush1.msra.mxu0 0.0
    %2182 = vmatprep.subr.mxu0 0.0
    %2183 = vmatpush1.msra.mxu0 0.0
    %2184 = vmatprep.subr.mxu0 0.0
    %2185 = vmatpush1.msra.mxu0 0.0
    %2186 = vmatprep.subr.mxu0 0.0
    %2187 = vmatpush1.msra.mxu0 0.0
    %2188 = vmatprep.subr.mxu0 0.0
    %2189 = vmatpush1.msra.mxu0 0.0
    %2190 = vmatprep.subr.mxu0 0.0
    %2191 = vmatpush1.msra.mxu0 0.0
    %2192 = vmatprep.subr.mxu0 0.0
    %2193 = vmatpush1.msra.mxu0 0.0
    %2194 = vmatprep.subr.mxu0 0.0
    %2195 = vmatpush1.msra.mxu0 0.0
    %2196 = vmatprep.subr.mxu0 0.0
    %2197 = vmatpush1.msra.mxu0 0.0
    %2198 = vmatprep.subr.mxu0 0.0
    %2199 = vmatpush1.msra.mxu0 0.0
    %2200 = vmatprep.subr.mxu0 0.0
    %2201 = vmatpush1.msra.mxu0 0.0
    %2202 = vmatprep.subr.mxu0 0.0
    %2203 = vmatpush1.msra.mxu0 0.0
    %2204 = vmatprep.mubr.f32.mxu0 0.0
    %2205 = vmatmul.mubr.f32.gmra.mrb[0].mxu0 %v2138
    %v2206 = vpop.f32.mrb[0].mxu0
    %v2207 = vadd.f32 0.0, %v2206
    %v2208 = vpop.f32.mrb[0].mxu0
    %2209 = vdwg.mxu0
    %v2211 = vrot.slane %v2132, 1
    %v2213 = vadd.f32 %v117, %v2211
    %v2214 = vxor.u32 %v2213, 2147483648
    %v2215 = vmul.f32 %v2214, 1.442695
    %v2216 = vpow.pop %v2215
    %v2217 = vadd.f32 %v2216, 1.0
    %v2218 = vrcp.pop %v2217
    %v2219 = vmul.f32 1.0, %v2218
    %v2220 = vtanh.pop %v2213
    %v2222 = vrot.slane %v1957, 7
    %v2224 = vmul.f32 %v2219, %v2222
    %2226 = vrot.lane.b32.xlu0 %v2220, 64
    %v2227 = vpop.permute.xlu0 %2226
    %v2229 = vmul.f32 %v2219, %v2227
    %2231 = vrot.lane.b32.xlu0 %v2229, 32
    %v2232 = vpop.permute.xlu0 %2231
    %v2234 = vadd.f32 %v2224, %v2232
    %v2235 = vtanh.pop %v2234
    %2237 = vrot.lane.b32.xlu0 %v2235, 64
    %v2238 = vpop.permute.xlu0 %2237
    %v2240 = vmul.f32 %v2219, %v2238
    %v2242 = vrot.slane %v2240, 7
    %2243 = vrot.lane.b32.xlu0 %v2242, 32
    %v2244 = vpop.permute.xlu0 %2243
    %v2245 = vsel %vm46, %v2244, 0
    %2247 = vmatprep.subr.mxu0 0.0
    %2248 = vmatpush1.msra.mxu0 %v28
    %2249 = vmatprep.subr.mxu0 0.0
    %2250 = vmatpush1.msra.mxu0 %v29
    %2251 = vmatprep.subr.mxu0 0.0
    %2252 = vmatpush1.msra.mxu0 %v30
    %2253 = vmatprep.subr.mxu0 0.0
    %2254 = vmatpush1.msra.mxu0 %v31
    %2255 = vmatprep.subr.mxu0 0.0
    %2256 = vmatpush1.msra.mxu0 0.0
    %2257 = vmatprep.subr.mxu0 0.0
    %2258 = vmatpush1.msra.mxu0 0.0
    %2259 = vmatprep.subr.mxu0 0.0
    %2260 = vmatpush1.msra.mxu0 0.0
    %2261 = vmatprep.subr.mxu0 0.0
    %2262 = vmatpush1.msra.mxu0 0.0
    %2263 = vmatprep.subr.mxu0 0.0
    %2264 = vmatpush1.msra.mxu0 0.0
    %2265 = vmatprep.subr.mxu0 0.0
    %2266 = vmatpush1.msra.mxu0 0.0
    %2267 = vmatprep.subr.mxu0 0.0
    %2268 = vmatpush1.msra.mxu0 0.0
    %2269 = vmatprep.subr.mxu0 0.0
    %2270 = vmatpush1.msra.mxu0 0.0
    %2271 = vmatprep.subr.mxu0 0.0
    %2272 = vmatpush1.msra.mxu0 0.0
    %2273 = vmatprep.subr.mxu0 0.0
    %2274 = vmatpush1.msra.mxu0 0.0
    %2275 = vmatprep.subr.mxu0 0.0
    %2276 = vmatpush1.msra.mxu0 0.0
    %2277 = vmatprep.subr.mxu0 0.0
    %2278 = vmatpush1.msra.mxu0 0.0
    %2279 = vmatprep.subr.mxu0 0.0
    %2280 = vmatpush1.msra.mxu0 0.0
    %2281 = vmatprep.subr.mxu0 0.0
    %2282 = vmatpush1.msra.mxu0 0.0
    %2283 = vmatprep.subr.mxu0 0.0
    %2284 = vmatpush1.msra.mxu0 0.0
    %2285 = vmatprep.subr.mxu0 0.0
    %2286 = vmatpush1.msra.mxu0 0.0
    %2287 = vmatprep.subr.mxu0 0.0
    %2288 = vmatpush1.msra.mxu0 0.0
    %2289 = vmatprep.subr.mxu0 0.0
    %2290 = vmatpush1.msra.mxu0 0.0
    %2291 = vmatprep.subr.mxu0 0.0
    %2292 = vmatpush1.msra.mxu0 0.0
    %2293 = vmatprep.subr.mxu0 0.0
    %2294 = vmatpush1.msra.mxu0 0.0
    %2295 = vmatprep.subr.mxu0 0.0
    %2296 = vmatpush1.msra.mxu0 0.0
    %2297 = vmatprep.subr.mxu0 0.0
    %2298 = vmatpush1.msra.mxu0 0.0
    %2299 = vmatprep.subr.mxu0 0.0
    %2300 = vmatpush1.msra.mxu0 0.0
    %2301 = vmatprep.subr.mxu0 0.0
    %2302 = vmatpush1.msra.mxu0 0.0
    %2303 = vmatprep.subr.mxu0 0.0
    %2304 = vmatpush1.msra.mxu0 0.0
    %2305 = vmatprep.subr.mxu0 0.0
    %2306 = vmatpush1.msra.mxu0 0.0
    %2307 = vmatprep.subr.mxu0 0.0
    %2308 = vmatpush1.msra.mxu0 0.0
    %2309 = vmatprep.subr.mxu0 0.0
    %2310 = vmatpush1.msra.mxu0 0.0
    %2311 = vmatprep.mubr.f32.mxu0 0.0
    %2312 = vmatmul.mubr.f32.gmra.mrb[0].mxu0 %v2245
    %v2313 = vpop.f32.mrb[0].mxu0
    %v2314 = vadd.f32 %v2207, %v2313
    %v2315 = vpop.f32.mrb[0].mxu0
    %2316 = vdwg.mxu0
    %v2317 = vadd.f32 %v2314, %v372
    %v2318 = vxor.u32 %v2317, 2147483648
    %v2319 = vmul.f32 %v2318, 1.442695
    %v2320 = vpow.pop %v2319
    %v2321 = vadd.f32 %v2320, 1.0
    %v2322 = vrcp.pop %v2321
    %v2323 = vmul.f32 1.0, %v2322
    %v2324 = vtanh.pop %v2317
    %v2325 = vmul.f32 %v2323, %v2058
    %2327 = vrot.lane.b32.xlu0 %v2324, 64
    %v2328 = vpop.permute.xlu0 %2327
    %v2330 = vmul.f32 %v2323, %v2328
    %2332 = vrot.lane.b32.xlu0 %v2330, 32
    %v2333 = vpop.permute.xlu0 %2332
    %v2335 = vadd.f32 %v2325, %v2333
    %v2336 = vtanh.pop %v2335
    %2338 = vrot.lane.b32.xlu0 %v2336, 64
    %v2339 = vpop.permute.xlu0 %2338
    %v2341 = vmul.f32 %v2323, %v2339
    %v2342 = vrot.slane %v679, 7
    %v2344 = vrot.slane %v956, 6
    %v2346 = vrot.slane %v1233, 5
    %v2348 = vrot.slane %v1510, 4
    %v2350 = vrot.slane %v1787, 3
    %v2352 = vrot.slane %v2064, 2
    %v2355 = vrot.slane %v2341, 1
    %vm2357 = vcmask 1040384
    %v2358 = vsel %vm2357, %v402, %v2342
    %vm2359 = vcmask 1041408
    %v2360 = vsel %vm2359, %v2358, %v2344
    %vm2361 = vcmask 1042432
    %v2362 = vsel %vm2361, %v2360, %v2346
    %vm2363 = vcmask 1043456
    %v2364 = vsel %vm2363, %v2362, %v2348
    %vm2365 = vcmask 1044480
    %v2366 = vsel %vm2365, %v2364, %v2350
    %vm2367 = vcmask 1045504
    %v2368 = vsel %vm2367, %v2366, %v2352
    %vm2369 = vcmask 1046528
    %v2370 = vsel %vm2369, %v2368, %v2355
    %v2371 = vld [vmem:[%s4] sm:$0xff]
    %v2372 = vld [vmem:[%s4 + $0x8] sm:$0xff]
    %v2373 = vld [vmem:[%s4 + $0x10] sm:$0xff]
    %v2374 = vld [vmem:[%s4 + $0x18] sm:$0xff]
    %v2375 = vld [vmem:[%s4 + $0x20] sm:$0x1]
    %v2376 = vlaneseq
    %v2377 = vshrl.u32 %v2376, 7
    %v2378 = vsub.s32 0, %v2377
    %v2379 = vrot.slane %v2375, %v2378
    %2381 = vrot.lane.b32.xlu0 %v2370, 32
    %v2382 = vpop.permute.xlu0 %2381
    %v2383 = vsel %vm46, %v2382, 0
    %2385 = vmatprep.subr.mxu0 0.0
    %2386 = vmatpush1.msra.mxu0 %v2371
    %2387 = vmatprep.subr.mxu0 0.0
    %2388 = vmatpush1.msra.mxu0 %v2372
    %2389 = vmatprep.subr.mxu0 0.0
    %2390 = vmatpush1.msra.mxu0 %v2373
    %2391 = vmatprep.subr.mxu0 0.0
    %2392 = vmatpush1.msra.mxu0 %v2374
    %2393 = vmatprep.subr.mxu0 0.0
    %2394 = vmatpush1.msra.mxu0 0.0
    %2395 = vmatprep.subr.mxu0 0.0
    %2396 = vmatpush1.msra.mxu0 0.0
    %2397 = vmatprep.subr.mxu0 0.0
    %2398 = vmatpush1.msra.mxu0 0.0
    %2399 = vmatprep.subr.mxu0 0.0
    %2400 = vmatpush1.msra.mxu0 0.0
    %2401 = vmatprep.subr.mxu0 0.0
    %2402 = vmatpush1.msra.mxu0 0.0
    %2403 = vmatprep.subr.mxu0 0.0
    %2404 = vmatpush1.msra.mxu0 0.0
    %2405 = vmatprep.subr.mxu0 0.0
    %2406 = vmatpush1.msra.mxu0 0.0
    %2407 = vmatprep.subr.mxu0 0.0
    %2408 = vmatpush1.msra.mxu0 0.0
    %2409 = vmatprep.subr.mxu0 0.0
    %2410 = vmatpush1.msra.mxu0 0.0
    %2411 = vmatprep.subr.mxu0 0.0
    %2412 = vmatpush1.msra.mxu0 0.0
    %2413 = vmatprep.subr.mxu0 0.0
    %2414 = vmatpush1.msra.mxu0 0.0
    %2415 = vmatprep.subr.mxu0 0.0
    %2416 = vmatpush1.msra.mxu0 0.0
    %2417 = vmatprep.subr.mxu0 0.0
    %2418 = vmatpush1.msra.mxu0 0.0
    %2419 = vmatprep.subr.mxu0 0.0
    %2420 = vmatpush1.msra.mxu0 0.0
    %2421 = vmatprep.subr.mxu0 0.0
    %2422 = vmatpush1.msra.mxu0 0.0
    %2423 = vmatprep.subr.mxu0 0.0
    %2424 = vmatpush1.msra.mxu0 0.0
    %2425 = vmatprep.subr.mxu0 0.0
    %2426 = vmatpush1.msra.mxu0 0.0
    %2427 = vmatprep.subr.mxu0 0.0
    %2428 = vmatpush1.msra.mxu0 0.0
    %2429 = vmatprep.subr.mxu0 0.0
    %2430 = vmatpush1.msra.mxu0 0.0
    %2431 = vmatprep.subr.mxu0 0.0
    %2432 = vmatpush1.msra.mxu0 0.0
    %2433 = vmatprep.subr.mxu0 0.0
    %2434 = vmatpush1.msra.mxu0 0.0
    %2435 = vmatprep.subr.mxu0 0.0
    %2436 = vmatpush1.msra.mxu0 0.0
    %2437 = vmatprep.subr.mxu0 0.0
    %2438 = vmatpush1.msra.mxu0 0.0
    %2439 = vmatprep.subr.mxu0 0.0
    %2440 = vmatpush1.msra.mxu0 0.0
    %2441 = vmatprep.subr.mxu0 0.0
    %2442 = vmatpush1.msra.mxu0 0.0
    %2443 = vmatprep.subr.mxu0 0.0
    %2444 = vmatpush1.msra.mxu0 0.0
    %2445 = vmatprep.subr.mxu0 0.0
    %2446 = vmatpush1.msra.mxu0 0.0
    %2447 = vmatprep.subr.mxu0 0.0
    %2448 = vmatpush1.msra.mxu0 0.0
    %2449 = vmatprep.mubr.f32.mxu0 0.0
    %2450 = vmatmul.mubr.f32.gmra.mrb[0].mxu0 %v2383
    %v2451 = vpop.f32.mrb[0].mxu0
    %v2452 = vadd.f32 %v2379, %v2451
    %v2453 = vpop.f32.mrb[0].mxu0
    %2454 = vdwg.mxu0
    %v2455 = vsel %vm46, %v2452, -inf
    %2456 = vmax.xlane.f32.xlu0 %v2455
    %v2457 = vpop.xlane.xlu0 %2456
    %v2458 = vsub.f32 %v2452, %v2457
    %v2459 = vmul.f32 %v2458, 1.442695
    %v2460 = vpow.pop %v2459
    %v2461 = vsel %vm46, %v2460, 0.0
    %2462 = vadd.xlane.f32.xlu0 %v2461
    %v2463 = vpop.xlane.xlu0 %2462
    %v2464 = vlog2.pop %v2463
    %v2465 = vmul.f32 %v2464, 0.6931472
    %v2466 = vadd.f32 %v2457, %v2465
    %v2467 = vsub.f32 %v2452, %v2466
    %2468 = vst.msk [vmem:[#allocation2] sm:$0xff] %vm46, %v2467
    // Predicated region
    $region26: #{lstm_forward.1} parent=1 // pred_check
      _
    $region27: #{lstm_forward.1} parent=1 // pred_check_branch
      %2470 = sbr.rel (0) target = $region29
    $region28: #{lstm_forward.1} parent=1 // pred_region
      %s2472 = ssub.s32 128, 128
      %2473 = vsyncadd [#allocation3], %s2472
      %s2475 = sshll.u32 [#allocation2], 4
      %s2476 = int_to_ptr.vmem [resolvable:$true] %s2475
      %2478 = dma.vmem_to_hbm [thread:$0]  %s2476, 128, %s6, [#allocation3]
    $region29: #{lstm_forward.1} parent=1 // pred_fallthru
      _
    // Predicated region
    $region30: #{lstm_forward.1} parent=1 // pred_check
      _
    $region31: #{lstm_forward.1} parent=1 // pred_check_branch
      %2480 = sbr.rel (0) target = $region33
    $region32: #{lstm_forward.1} parent=1 // pred_region
      %2481 = dma.done [#allocation3], 128
    $region33: #{lstm_forward.1} parent=1 // pred_fallthru
      _
    %2482 = vsyncpa [#allocation3], 1

</llo_original>
